<compile_context>
chip_gen: v7x
topology: tpu7x:2x2x1
jax: 0.10.0
libtpu: 0.0.40
codegen_flags: <defaults>
</compile_context>

<pallas_src>
import functools

import jax
import jax.numpy as jnp
from jax.experimental import pallas as pl
from jax.experimental.pallas import tpu as pltpu


def _decoder_kernel(x2_ref, wih0_ref, whh0_ref, b0_ref, wcat_ref, bcat_ref,
                    fcw_ref, fcb_ref, out_ref, *, T, B, num_layers):
    """Single invocation: full RNN recurrence + output projection.

    x2_ref   : (T*B, H)        x_enc flattened over (T, B)
    wih0_ref : (H, H)          layer-0 input->hidden weight, [in, out]
    whh0_ref : (H, H)          layer-0 hidden->hidden weight, [in, out]
    b0_ref   : (1, H)          b_ih[0] + b_hh[0]
    wcat_ref : (max(L-1,1), 2H, H)   layers>=1 fused [W_ih^T ; W_hh^T]
    bcat_ref : (max(L-1,1), 1, H)    layers>=1 fused b_ih + b_hh
    fcw_ref  : (H, Z)          linear weight, [in, out]
    fcb_ref  : (1, Z)
    out_ref  : (T*B, Z)
    """
    # Hoisted layer-0 input projection for ALL timesteps at once (one MXU op).
    x_proj = (jnp.dot(x2_ref[...], wih0_ref[...],
                      preferred_element_type=jnp.float32)
              + b0_ref[...])                       # (T*B, H)
    whh0 = whh0_ref[...]

    # Load fused weights / biases for upper layers once (resident in vregs).
    wcats = [wcat_ref[l] for l in range(num_layers - 1)]   # each (2H, H)
    bcats = [bcat_ref[l] for l in range(num_layers - 1)]   # each (1, H)

    H = whh0.shape[0]
    h = [jnp.zeros((B, H), jnp.float32) for _ in range(num_layers)]

    outs = []
    for t in range(T):                             # unrolled: T static & small
        x_t = x_proj[t * B:(t + 1) * B]            # (B, H), static slice
        # layer 0: x-projection already done, only the h-recurrence matmul.
        h[0] = jnp.tanh(x_t + jnp.dot(h[0], whh0,
                                      preferred_element_type=jnp.float32))
        # layers >= 1: fused [h_below, h_prev] @ [W_ih^T ; W_hh^T] + b.
        for l in range(1, num_layers):
            lhs = jnp.concatenate([h[l - 1], h[l]], axis=-1)    # (B, 2H)
            h[l] = jnp.tanh(jnp.dot(lhs, wcats[l - 1],
                                    preferred_element_type=jnp.float32)
                            + bcats[l - 1])
        outs.append(h[num_layers - 1])

    # Deferred final Linear: one matmul + bias, one output store.
    h_all = jnp.concatenate(outs, axis=0)          # (T*B, H)
    out = (jnp.dot(h_all, fcw_ref[...], preferred_element_type=jnp.float32)
           + fcb_ref[...])                         # (T*B, Z)
    out_ref[...] = out.astype(out_ref.dtype)


def decoder_forward(x_enc, params):
    """x_enc: (T, B, H) float32.  Returns (T, B, Z)."""
    T, B, H = x_enc.shape
    w_ih = params["w_ih"]          # (L, H, H)  torch layout [out, in]
    w_hh = params["w_hh"]          # (L, H, H)  torch layout [out, in]
    b_ih = params["b_ih"]          # (L, H)
    b_hh = params["b_hh"]          # (L, H)
    fc_w = params["fc_w"]          # (Z, H)     torch layout [out, in]
    fc_b = params["fc_b"]          # (Z,)
    L = w_ih.shape[0]
    Z = fc_w.shape[0]
    f32 = jnp.float32

    # Wrapper-side prep: flatten time*batch, transpose weights to [in, out],
    # fuse the two per-layer biases, and stack [W_ih^T ; W_hh^T] along K.
    x2 = x_enc.reshape(T * B, H).astype(f32)
    wih0 = jnp.transpose(w_ih[0]).astype(f32)                     # (H, H)
    whh0 = jnp.transpose(w_hh[0]).astype(f32)                     # (H, H)
    b0 = (b_ih[0] + b_hh[0]).reshape(1, H).astype(f32)            # (1, H)
    if L > 1:
        wcat = jnp.concatenate(
            [jnp.transpose(w_ih[1:], (0, 2, 1)),
             jnp.transpose(w_hh[1:], (0, 2, 1))], axis=1).astype(f32)  # (L-1, 2H, H)
        bcat = (b_ih[1:] + b_hh[1:]).reshape(L - 1, 1, H).astype(f32)
    else:
        # Unused placeholders so the kernel signature stays fixed.
        wcat = jnp.zeros((1, 2 * H, H), f32)
        bcat = jnp.zeros((1, 1, H), f32)
    Lm1 = max(L - 1, 1)
    fcw = jnp.transpose(fc_w).astype(f32)                         # (H, Z)
    fcb = fc_b.reshape(1, Z).astype(f32)

    kernel = functools.partial(_decoder_kernel, T=T, B=B, num_layers=L)

    out2 = pl.pallas_call(
        kernel,
        out_shape=jax.ShapeDtypeStruct((T * B, Z), f32),
        grid_spec=pltpu.PrefetchScalarGridSpec(
            num_scalar_prefetch=0,
            grid=(1,),                                            # single step
            in_specs=[
                pl.BlockSpec((T * B, H), lambda i: (0, 0)),       # x (full)
                pl.BlockSpec((H, H), lambda i: (0, 0)),           # w_ih[0]^T
                pl.BlockSpec((H, H), lambda i: (0, 0)),           # w_hh[0]^T
                pl.BlockSpec((1, H), lambda i: (0, 0)),           # b0
                pl.BlockSpec((Lm1, 2 * H, H), lambda i: (0, 0, 0)),  # W_cat
                pl.BlockSpec((Lm1, 1, H), lambda i: (0, 0, 0)),      # b_cat
                pl.BlockSpec((H, Z), lambda i: (0, 0)),           # fc_w^T
                pl.BlockSpec((1, Z), lambda i: (0, 0)),           # fc_b
            ],
            out_specs=pl.BlockSpec((T * B, Z), lambda i: (0, 0)),
            scratch_shapes=[],
        ),
        compiler_params=pltpu.CompilerParams(
            dimension_semantics=("arbitrary",),
        ),
    )(x2, wih0, whh0, b0, wcat, bcat, fcw, fcb)

    return out2.reshape(T, B, Z)


def decoder_reference(x_enc, params):
    """Pure-JAX reference mirroring torch.nn.RNN(tanh) + nn.Linear."""
    w_ih, w_hh = params["w_ih"], params["w_hh"]
    b_ih, b_hh = params["b_ih"], params["b_hh"]
    fc_w, fc_b = params["fc_w"], params["fc_b"]
    L = w_ih.shape[0]
    T, B, H = x_enc.shape

    layer_in = x_enc
    for l in range(L):
        h = jnp.zeros((B, H), jnp.float32)
        outs = []
        for t in range(T):
            h = jnp.tanh(layer_in[t] @ w_ih[l].T + b_ih[l]
                         + h @ w_hh[l].T + b_hh[l])
            outs.append(h)
        layer_in = jnp.stack(outs, axis=0)
    return layer_in @ fc_w.T + fc_b


if __name__ == "__main__":
    # args: hidden_dim=32, z_dim=8, num_layer=2 ; seq=8, batch=4
    T, B, H, Z, L = 8, 4, 32, 8, 2

    key = jax.random.PRNGKey(0)
    ks = jax.random.split(key, 8)
    scale = 1.0 / jnp.sqrt(H)
    params = {
        "w_ih": jax.random.uniform(ks[0], (L, H, H), jnp.float32, -scale, scale),
        "w_hh": jax.random.uniform(ks[1], (L, H, H), jnp.float32, -scale, scale),
        "b_ih": jax.random.uniform(ks[2], (L, H), jnp.float32, -scale, scale),
        "b_hh": jax.random.uniform(ks[3], (L, H), jnp.float32, -scale, scale),
        "fc_w": jax.random.uniform(ks[4], (Z, H), jnp.float32, -scale, scale),
        "fc_b": jax.random.uniform(ks[5], (Z,), jnp.float32, -scale, scale),
    }
    x_enc = jax.random.normal(ks[6], (T, B, H), jnp.float32)

    out = decoder_forward(x_enc, params)
    out = jax.block_until_ready(out)

    ref = decoder_reference(x_enc, params)
    assert out.shape == (T, B, Z), out.shape
    assert jnp.allclose(out, ref, atol=1e-5, rtol=1e-5), \
        float(jnp.max(jnp.abs(out - ref)))

    print("KERNEL_OK")
</pallas_src>

<mosaic_0001>
module attributes {stable_mosaic.version = 11 : i64} {
  func.func @_decoder_kernel(%arg0: i32, %arg1: memref<32x32xf32, #tpu.memory_space<vmem>>, %arg2: memref<32x32xf32, #tpu.memory_space<vmem>>, %arg3: memref<32x32xf32, #tpu.memory_space<vmem>>, %arg4: memref<1x32xf32, #tpu.memory_space<vmem>>, %arg5: memref<1x64x32xf32, #tpu.memory_space<vmem>>, %arg6: memref<1x1x32xf32, #tpu.memory_space<vmem>>, %arg7: memref<32x8xf32, #tpu.memory_space<vmem>>, %arg8: memref<1x8xf32, #tpu.memory_space<vmem>>, %arg9: memref<32x8xf32, #tpu.memory_space<vmem>>) attributes {dimension_semantics = [#tpu.dimension_semantics<arbitrary>], iteration_bounds = array<i64: 1>, scalar_prefetch = 0 : i64, scratch_operands = 0 : i64, tpu.core_type = #tpu.core_type<tc>, window_params = [{pipeline_mode = #tpu.pipeline_mode<synchronous>, transform_indices = @transform_0, window_bounds = array<i64: 32, 32>}, {pipeline_mode = #tpu.pipeline_mode<synchronous>, transform_indices = @transform_1, window_bounds = array<i64: 32, 32>}, {pipeline_mode = #tpu.pipeline_mode<synchronous>, transform_indices = @transform_2, window_bounds = array<i64: 32, 32>}, {pipeline_mode = #tpu.pipeline_mode<synchronous>, transform_indices = @transform_3, window_bounds = array<i64: 1, 32>}, {pipeline_mode = #tpu.pipeline_mode<synchronous>, transform_indices = @transform_4, window_bounds = array<i64: 1, 64, 32>}, {pipeline_mode = #tpu.pipeline_mode<synchronous>, transform_indices = @transform_5, window_bounds = array<i64: 1, 1, 32>}, {pipeline_mode = #tpu.pipeline_mode<synchronous>, transform_indices = @transform_6, window_bounds = array<i64: 32, 8>}, {pipeline_mode = #tpu.pipeline_mode<synchronous>, transform_indices = @transform_7, window_bounds = array<i64: 1, 8>}, {pipeline_mode = #tpu.pipeline_mode<synchronous>, transform_indices = @transform_8, window_bounds = array<i64: 32, 8>}]} {
    %c0 = arith.constant 0 : index
    %c0_0 = arith.constant 0 : index
    %0 = vector.load %arg1[%c0, %c0_0] : memref<32x32xf32, #tpu.memory_space<vmem>>, vector<32x32xf32>
    %c0_1 = arith.constant 0 : index
    %c0_2 = arith.constant 0 : index
    %1 = vector.load %arg2[%c0_1, %c0_2] : memref<32x32xf32, #tpu.memory_space<vmem>>, vector<32x32xf32>
    %cst = arith.constant dense<0.000000e+00> : vector<32x32xf32>
    %2 = tpu.matmul %0, %1, %cst {dimension_numbers = #tpu.dot_dimension_numbers<[1], [0], [0], [1], [0, 0, 1, 1], [], []>} : vector<32x32xf32>, vector<32x32xf32>, vector<32x32xf32> -> vector<32x32xf32>
    %c0_3 = arith.constant 0 : index
    %c0_4 = arith.constant 0 : index
    %3 = vector.load %arg4[%c0_3, %c0_4] : memref<1x32xf32, #tpu.memory_space<vmem>>, vector<1x32xf32>
    %4 = vector.broadcast %3 : vector<1x32xf32> to vector<32x32xf32>
    %5 = arith.addf %2, %4 : vector<32x32xf32>
    %c0_5 = arith.constant 0 : index
    %c0_6 = arith.constant 0 : index
    %6 = vector.load %arg3[%c0_5, %c0_6] : memref<32x32xf32, #tpu.memory_space<vmem>>, vector<32x32xf32>
    %c0_7 = arith.constant 0 : index
    %c0_8 = arith.constant 0 : index
    %c0_9 = arith.constant 0 : index
    %7 = vector.load %arg5[%c0_7, %c0_8, %c0_9] : memref<1x64x32xf32, #tpu.memory_space<vmem>>, vector<1x64x32xf32>
    %8 = vector.shape_cast %7 : vector<1x64x32xf32> to vector<64x32xf32>
    %c0_10 = arith.constant 0 : index
    %c0_11 = arith.constant 0 : index
    %c0_12 = arith.constant 0 : index
    %9 = vector.load %arg6[%c0_10, %c0_11, %c0_12] : memref<1x1x32xf32, #tpu.memory_space<vmem>>, vector<1x1x32xf32>
    %10 = vector.shape_cast %9 : vector<1x1x32xf32> to vector<1x32xf32>
    %cst_13 = arith.constant 0.000000e+00 : f32
    %11 = vector.broadcast %cst_13 : f32 to vector<4x32xf32>
    %cst_14 = arith.constant 0.000000e+00 : f32
    %12 = vector.broadcast %cst_14 : f32 to vector<4x32xf32>
    %13 = vector.extract_strided_slice %5 {offsets = [0, 0], sizes = [4, 32], strides = [1, 1]} : vector<32x32xf32> to vector<4x32xf32>
    %cst_15 = arith.constant dense<0.000000e+00> : vector<4x32xf32>
    %14 = tpu.matmul %11, %6, %cst_15 {dimension_numbers = #tpu.dot_dimension_numbers<[1], [0], [0], [1], [0, 0, 1, 1], [], []>} : vector<4x32xf32>, vector<32x32xf32>, vector<4x32xf32> -> vector<4x32xf32>
    %15 = arith.addf %13, %14 : vector<4x32xf32>
    %16 = math.tanh %15 : vector<4x32xf32>
    %17 = tpu.concatenate %16, %12 in 1 : vector<4x32xf32>, vector<4x32xf32> -> vector<4x64xf32>
    %cst_16 = arith.constant dense<0.000000e+00> : vector<4x32xf32>
    %18 = tpu.matmul %17, %8, %cst_16 {dimension_numbers = #tpu.dot_dimension_numbers<[1], [0], [0], [1], [0, 0, 1, 1], [], []>} : vector<4x64xf32>, vector<64x32xf32>, vector<4x32xf32> -> vector<4x32xf32>
    %19 = vector.broadcast %10 : vector<1x32xf32> to vector<4x32xf32>
    %20 = arith.addf %18, %19 : vector<4x32xf32>
    %21 = math.tanh %20 : vector<4x32xf32>
    %22 = vector.extract_strided_slice %5 {offsets = [4, 0], sizes = [4, 32], strides = [1, 1]} : vector<32x32xf32> to vector<4x32xf32>
    %cst_17 = arith.constant dense<0.000000e+00> : vector<4x32xf32>
    %23 = tpu.matmul %16, %6, %cst_17 {dimension_numbers = #tpu.dot_dimension_numbers<[1], [0], [0], [1], [0, 0, 1, 1], [], []>} : vector<4x32xf32>, vector<32x32xf32>, vector<4x32xf32> -> vector<4x32xf32>
    %24 = arith.addf %22, %23 : vector<4x32xf32>
    %25 = math.tanh %24 : vector<4x32xf32>
    %26 = tpu.concatenate %25, %21 in 1 : vector<4x32xf32>, vector<4x32xf32> -> vector<4x64xf32>
    %cst_18 = arith.constant dense<0.000000e+00> : vector<4x32xf32>
    %27 = tpu.matmul %26, %8, %cst_18 {dimension_numbers = #tpu.dot_dimension_numbers<[1], [0], [0], [1], [0, 0, 1, 1], [], []>} : vector<4x64xf32>, vector<64x32xf32>, vector<4x32xf32> -> vector<4x32xf32>
    %28 = vector.broadcast %10 : vector<1x32xf32> to vector<4x32xf32>
    %29 = arith.addf %27, %28 : vector<4x32xf32>
    %30 = math.tanh %29 : vector<4x32xf32>
    %31 = vector.extract_strided_slice %5 {offsets = [8, 0], sizes = [4, 32], strides = [1, 1]} : vector<32x32xf32> to vector<4x32xf32>
    %cst_19 = arith.constant dense<0.000000e+00> : vector<4x32xf32>
    %32 = tpu.matmul %25, %6, %cst_19 {dimension_numbers = #tpu.dot_dimension_numbers<[1], [0], [0], [1], [0, 0, 1, 1], [], []>} : vector<4x32xf32>, vector<32x32xf32>, vector<4x32xf32> -> vector<4x32xf32>
    %33 = arith.addf %31, %32 : vector<4x32xf32>
    %34 = math.tanh %33 : vector<4x32xf32>
    %35 = tpu.concatenate %34, %30 in 1 : vector<4x32xf32>, vector<4x32xf32> -> vector<4x64xf32>
    %cst_20 = arith.constant dense<0.000000e+00> : vector<4x32xf32>
    %36 = tpu.matmul %35, %8, %cst_20 {dimension_numbers = #tpu.dot_dimension_numbers<[1], [0], [0], [1], [0, 0, 1, 1], [], []>} : vector<4x64xf32>, vector<64x32xf32>, vector<4x32xf32> -> vector<4x32xf32>
    %37 = vector.broadcast %10 : vector<1x32xf32> to vector<4x32xf32>
    %38 = arith.addf %36, %37 : vector<4x32xf32>
    %39 = math.tanh %38 : vector<4x32xf32>
    %40 = vector.extract_strided_slice %5 {offsets = [12, 0], sizes = [4, 32], strides = [1, 1]} : vector<32x32xf32> to vector<4x32xf32>
    %cst_21 = arith.constant dense<0.000000e+00> : vector<4x32xf32>
    %41 = tpu.matmul %34, %6, %cst_21 {dimension_numbers = #tpu.dot_dimension_numbers<[1], [0], [0], [1], [0, 0, 1, 1], [], []>} : vector<4x32xf32>, vector<32x32xf32>, vector<4x32xf32> -> vector<4x32xf32>
    %42 = arith.addf %40, %41 : vector<4x32xf32>
    %43 = math.tanh %42 : vector<4x32xf32>
    %44 = tpu.concatenate %43, %39 in 1 : vector<4x32xf32>, vector<4x32xf32> -> vector<4x64xf32>
    %cst_22 = arith.constant dense<0.000000e+00> : vector<4x32xf32>
    %45 = tpu.matmul %44, %8, %cst_22 {dimension_numbers = #tpu.dot_dimension_numbers<[1], [0], [0], [1], [0, 0, 1, 1], [], []>} : vector<4x64xf32>, vector<64x32xf32>, vector<4x32xf32> -> vector<4x32xf32>
    %46 = vector.broadcast %10 : vector<1x32xf32> to vector<4x32xf32>
    %47 = arith.addf %45, %46 : vector<4x32xf32>
    %48 = math.tanh %47 : vector<4x32xf32>
    %49 = vector.extract_strided_slice %5 {offsets = [16, 0], sizes = [4, 32], strides = [1, 1]} : vector<32x32xf32> to vector<4x32xf32>
    %cst_23 = arith.constant dense<0.000000e+00> : vector<4x32xf32>
    %50 = tpu.matmul %43, %6, %cst_23 {dimension_numbers = #tpu.dot_dimension_numbers<[1], [0], [0], [1], [0, 0, 1, 1], [], []>} : vector<4x32xf32>, vector<32x32xf32>, vector<4x32xf32> -> vector<4x32xf32>
    %51 = arith.addf %49, %50 : vector<4x32xf32>
    %52 = math.tanh %51 : vector<4x32xf32>
    %53 = tpu.concatenate %52, %48 in 1 : vector<4x32xf32>, vector<4x32xf32> -> vector<4x64xf32>
    %cst_24 = arith.constant dense<0.000000e+00> : vector<4x32xf32>
    %54 = tpu.matmul %53, %8, %cst_24 {dimension_numbers = #tpu.dot_dimension_numbers<[1], [0], [0], [1], [0, 0, 1, 1], [], []>} : vector<4x64xf32>, vector<64x32xf32>, vector<4x32xf32> -> vector<4x32xf32>
    %55 = vector.broadcast %10 : vector<1x32xf32> to vector<4x32xf32>
    %56 = arith.addf %54, %55 : vector<4x32xf32>
    %57 = math.tanh %56 : vector<4x32xf32>
    %58 = vector.extract_strided_slice %5 {offsets = [20, 0], sizes = [4, 32], strides = [1, 1]} : vector<32x32xf32> to vector<4x32xf32>
    %cst_25 = arith.constant dense<0.000000e+00> : vector<4x32xf32>
    %59 = tpu.matmul %52, %6, %cst_25 {dimension_numbers = #tpu.dot_dimension_numbers<[1], [0], [0], [1], [0, 0, 1, 1], [], []>} : vector<4x32xf32>, vector<32x32xf32>, vector<4x32xf32> -> vector<4x32xf32>
    %60 = arith.addf %58, %59 : vector<4x32xf32>
    %61 = math.tanh %60 : vector<4x32xf32>
    %62 = tpu.concatenate %61, %57 in 1 : vector<4x32xf32>, vector<4x32xf32> -> vector<4x64xf32>
    %cst_26 = arith.constant dense<0.000000e+00> : vector<4x32xf32>
    %63 = tpu.matmul %62, %8, %cst_26 {dimension_numbers = #tpu.dot_dimension_numbers<[1], [0], [0], [1], [0, 0, 1, 1], [], []>} : vector<4x64xf32>, vector<64x32xf32>, vector<4x32xf32> -> vector<4x32xf32>
    %64 = vector.broadcast %10 : vector<1x32xf32> to vector<4x32xf32>
    %65 = arith.addf %63, %64 : vector<4x32xf32>
    %66 = math.tanh %65 : vector<4x32xf32>
    %67 = vector.extract_strided_slice %5 {offsets = [24, 0], sizes = [4, 32], strides = [1, 1]} : vector<32x32xf32> to vector<4x32xf32>
    %cst_27 = arith.constant dense<0.000000e+00> : vector<4x32xf32>
    %68 = tpu.matmul %61, %6, %cst_27 {dimension_numbers = #tpu.dot_dimension_numbers<[1], [0], [0], [1], [0, 0, 1, 1], [], []>} : vector<4x32xf32>, vector<32x32xf32>, vector<4x32xf32> -> vector<4x32xf32>
    %69 = arith.addf %67, %68 : vector<4x32xf32>
    %70 = math.tanh %69 : vector<4x32xf32>
    %71 = tpu.concatenate %70, %66 in 1 : vector<4x32xf32>, vector<4x32xf32> -> vector<4x64xf32>
    %cst_28 = arith.constant dense<0.000000e+00> : vector<4x32xf32>
    %72 = tpu.matmul %71, %8, %cst_28 {dimension_numbers = #tpu.dot_dimension_numbers<[1], [0], [0], [1], [0, 0, 1, 1], [], []>} : vector<4x64xf32>, vector<64x32xf32>, vector<4x32xf32> -> vector<4x32xf32>
    %73 = vector.broadcast %10 : vector<1x32xf32> to vector<4x32xf32>
    %74 = arith.addf %72, %73 : vector<4x32xf32>
    %75 = math.tanh %74 : vector<4x32xf32>
    %76 = vector.extract_strided_slice %5 {offsets = [28, 0], sizes = [4, 32], strides = [1, 1]} : vector<32x32xf32> to vector<4x32xf32>
    %cst_29 = arith.constant dense<0.000000e+00> : vector<4x32xf32>
    %77 = tpu.matmul %70, %6, %cst_29 {dimension_numbers = #tpu.dot_dimension_numbers<[1], [0], [0], [1], [0, 0, 1, 1], [], []>} : vector<4x32xf32>, vector<32x32xf32>, vector<4x32xf32> -> vector<4x32xf32>
    %78 = arith.addf %76, %77 : vector<4x32xf32>
    %79 = math.tanh %78 : vector<4x32xf32>
    %80 = tpu.concatenate %79, %75 in 1 : vector<4x32xf32>, vector<4x32xf32> -> vector<4x64xf32>
    %cst_30 = arith.constant dense<0.000000e+00> : vector<4x32xf32>
    %81 = tpu.matmul %80, %8, %cst_30 {dimension_numbers = #tpu.dot_dimension_numbers<[1], [0], [0], [1], [0, 0, 1, 1], [], []>} : vector<4x64xf32>, vector<64x32xf32>, vector<4x32xf32> -> vector<4x32xf32>
    %82 = vector.broadcast %10 : vector<1x32xf32> to vector<4x32xf32>
    %83 = arith.addf %81, %82 : vector<4x32xf32>
    %84 = math.tanh %83 : vector<4x32xf32>
    %85 = tpu.concatenate %21, %30, %39, %48, %57, %66, %75, %84 in 0 : vector<4x32xf32>, vector<4x32xf32>, vector<4x32xf32>, vector<4x32xf32>, vector<4x32xf32>, vector<4x32xf32>, vector<4x32xf32>, vector<4x32xf32> -> vector<32x32xf32>
    %c0_31 = arith.constant 0 : index
    %c0_32 = arith.constant 0 : index
    %86 = vector.load %arg7[%c0_31, %c0_32] : memref<32x8xf32, #tpu.memory_space<vmem>>, vector<32x8xf32>
    %cst_33 = arith.constant dense<0.000000e+00> : vector<32x8xf32>
    %87 = tpu.matmul %85, %86, %cst_33 {dimension_numbers = #tpu.dot_dimension_numbers<[1], [0], [0], [1], [0, 0, 1, 1], [], []>} : vector<32x32xf32>, vector<32x8xf32>, vector<32x8xf32> -> vector<32x8xf32>
    %c0_34 = arith.constant 0 : index
    %c0_35 = arith.constant 0 : index
    %88 = vector.load %arg8[%c0_34, %c0_35] : memref<1x8xf32, #tpu.memory_space<vmem>>, vector<1x8xf32>
    %89 = vector.broadcast %88 : vector<1x8xf32> to vector<32x8xf32>
    %90 = arith.addf %87, %89 : vector<32x8xf32>
    %c0_36 = arith.constant 0 : index
    %c0_37 = arith.constant 0 : index
    %91 = vector.load %arg9[%c0_36, %c0_37] : memref<32x8xf32, #tpu.memory_space<vmem>>, vector<32x8xf32>
    tpu.vector_store %arg9[%c0_36, %c0_37], %90 {strides = array<i32>} : memref<32x8xf32, #tpu.memory_space<vmem>>, vector<32x8xf32>,
    return
  }
  func.func @transform_0(%arg0: i32) -> (i32, i32) {
    %c0_i32 = arith.constant 0 : i32
    %c0_i32_0 = arith.constant 0 : i32
    %c0_i32_1 = arith.constant 0 : i32
    return %c0_i32, %c0_i32_0 : i32, i32
  }
  func.func @transform_1(%arg0: i32) -> (i32, i32) {
    %c0_i32 = arith.constant 0 : i32
    %c0_i32_0 = arith.constant 0 : i32
    %c0_i32_1 = arith.constant 0 : i32
    return %c0_i32, %c0_i32_0 : i32, i32
  }
  func.func @transform_2(%arg0: i32) -> (i32, i32) {
    %c0_i32 = arith.constant 0 : i32
    %c0_i32_0 = arith.constant 0 : i32
    %c0_i32_1 = arith.constant 0 : i32
    return %c0_i32, %c0_i32_0 : i32, i32
  }
  func.func @transform_3(%arg0: i32) -> (i32, i32) {
    %c0_i32 = arith.constant 0 : i32
    %c0_i32_0 = arith.constant 0 : i32
    %c0_i32_1 = arith.constant 0 : i32
    return %c0_i32, %c0_i32_0 : i32, i32
  }
  func.func @transform_4(%arg0: i32) -> (i32, i32, i32) {
    %c0_i32 = arith.constant 0 : i32
    %c0_i32_0 = arith.constant 0 : i32
    %c0_i32_1 = arith.constant 0 : i32
    %c0_i32_2 = arith.constant 0 : i32
    return %c0_i32, %c0_i32_0, %c0_i32_1 : i32, i32, i32
  }
  func.func @transform_5(%arg0: i32) -> (i32, i32, i32) {
    %c0_i32 = arith.constant 0 : i32
    %c0_i32_0 = arith.constant 0 : i32
    %c0_i32_1 = arith.constant 0 : i32
    %c0_i32_2 = arith.constant 0 : i32
    return %c0_i32, %c0_i32_0, %c0_i32_1 : i32, i32, i32
  }
  func.func @transform_6(%arg0: i32) -> (i32, i32) {
    %c0_i32 = arith.constant 0 : i32
    %c0_i32_0 = arith.constant 0 : i32
    %c0_i32_1 = arith.constant 0 : i32
    return %c0_i32, %c0_i32_0 : i32, i32
  }
  func.func @transform_7(%arg0: i32) -> (i32, i32) {
    %c0_i32 = arith.constant 0 : i32
    %c0_i32_0 = arith.constant 0 : i32
    %c0_i32_1 = arith.constant 0 : i32
    return %c0_i32, %c0_i32_0 : i32, i32
  }
  func.func @transform_8(%arg0: i32) -> (i32, i32) {
    %c0_i32 = arith.constant 0 : i32
    %c0_i32_0 = arith.constant 0 : i32
    %c0_i32_1 = arith.constant 0 : i32
    return %c0_i32, %c0_i32_0 : i32, i32
  }
}

</mosaic_0001>

<llo_original>
// kernel: tpu_custom_call.1
$region0: #{tpu_custom_call.1}
  #allocation0 [shape = 'u32[]', space=smem, size = 0x4, offset = 0x4, fixed_abs, tag = 'smem constant byte address 0x4 - core index']
  #allocation1 [shape = 'u32[144,128]{1,0:T(1,128)}', space=vmem, size = 0x12000, scoped, tag = 'internal scratch']
  %s0 = inlined_call_operand.vmem [shape: f32[32,32], index: 0, kind: input, shape index: {}]
  %s1 = inlined_call_operand.vmem [shape: f32[32,32], index: 1, kind: input, shape index: {}]
  %s2 = inlined_call_operand.vmem [shape: f32[32,32], index: 2, kind: input, shape index: {}]
  %s3 = inlined_call_operand.vmem [shape: f32[1,32], index: 3, kind: input, shape index: {}]
  %s4 = inlined_call_operand.vmem [shape: f32[1,64,32], index: 4, kind: input, shape index: {}]
  %s5 = inlined_call_operand.vmem [shape: f32[1,1,32], index: 5, kind: input, shape index: {}]
  %s6 = inlined_call_operand.vmem [shape: f32[32,8], index: 6, kind: input, shape index: {}]
  %s7 = inlined_call_operand.vmem [shape: f32[1,8], index: 7, kind: input, shape index: {}]
  %s8 = inlined_call_operand.vmem [shape: f32[32,8], index: 8, kind: output, shape index: {}]
  %s9 = sld [smem:[#allocation0]]
  $region42: #{tpu_custom_call.1} parent=0
    _
  %s11 = ssub.s32 1, %s9
  %s12 = scalar_select 0, %s11, %s9
  // Predicated region
  $region2: #{tpu_custom_call.1} parent=0 // pred_check
    _
  $region3: #{tpu_custom_call.1} parent=0 // pred_check_branch
    %14 = sbr.rel (0) target = $region5
  $region4: #{tpu_custom_call.1} parent=0 // pred_region
    _
  $region5: #{tpu_custom_call.1} parent=0 // pred_fallthru
    _
  // Predicated region
  $region6: #{tpu_custom_call.1} parent=0 // pred_check
    _
  $region7: #{tpu_custom_call.1} parent=0 // pred_check_branch
    %16 = sbr.rel (0) target = $region9
  $region8: #{tpu_custom_call.1} parent=0 // pred_region
    _
  $region9: #{tpu_custom_call.1} parent=0 // pred_fallthru
    _
  // Predicated region
  $region10: #{tpu_custom_call.1} parent=0 // pred_check
    _
  $region11: #{tpu_custom_call.1} parent=0 // pred_check_branch
    %18 = sbr.rel (0) target = $region13
  $region12: #{tpu_custom_call.1} parent=0 // pred_region
    _
  $region13: #{tpu_custom_call.1} parent=0 // pred_fallthru
    _
  // Predicated region
  $region14: #{tpu_custom_call.1} parent=0 // pred_check
    _
  $region15: #{tpu_custom_call.1} parent=0 // pred_check_branch
    %20 = sbr.rel (0) target = $region17
  $region16: #{tpu_custom_call.1} parent=0 // pred_region
    _
  $region17: #{tpu_custom_call.1} parent=0 // pred_fallthru
    _
  // Predicated region
  $region18: #{tpu_custom_call.1} parent=0 // pred_check
    _
  $region19: #{tpu_custom_call.1} parent=0 // pred_check_branch
    %22 = sbr.rel (0) target = $region21
  $region20: #{tpu_custom_call.1} parent=0 // pred_region
    _
  $region21: #{tpu_custom_call.1} parent=0 // pred_fallthru
    _
  // Predicated region
  $region22: #{tpu_custom_call.1} parent=0 // pred_check
    _
  $region23: #{tpu_custom_call.1} parent=0 // pred_check_branch
    %24 = sbr.rel (0) target = $region25
  $region24: #{tpu_custom_call.1} parent=0 // pred_region
    _
  $region25: #{tpu_custom_call.1} parent=0 // pred_fallthru
    _
  // Predicated region
  $region26: #{tpu_custom_call.1} parent=0 // pred_check
    _
  $region27: #{tpu_custom_call.1} parent=0 // pred_check_branch
    %26 = sbr.rel (0) target = $region29
  $region28: #{tpu_custom_call.1} parent=0 // pred_region
    _
  $region29: #{tpu_custom_call.1} parent=0 // pred_fallthru
    _
  // Predicated region
  $region30: #{tpu_custom_call.1} parent=0 // pred_check
    _
  $region31: #{tpu_custom_call.1} parent=0 // pred_check_branch
    %28 = sbr.rel (0) target = $region33
  $region32: #{tpu_custom_call.1} parent=0 // pred_region
    _
  $region33: #{tpu_custom_call.1} parent=0 // pred_fallthru
    _
  %v29 = vld [vmem:[%s0] sm:$0xff]
  %v30 = vld [vmem:[%s0 + $0x8] sm:$0xff]
  %v31 = vld [vmem:[%s0 + $0x10] sm:$0xff]
  %v32 = vld [vmem:[%s0 + $0x18] sm:$0xff]
  %v33 = vld [vmem:[%s1] sm:$0xff]
  %v34 = vld [vmem:[%s1 + $0x8] sm:$0xff]
  %v35 = vld [vmem:[%s1 + $0x10] sm:$0xff]
  %v36 = vld [vmem:[%s1 + $0x18] sm:$0xff]
  %v37 = vld [vmem:[%s3] sm:$0x1]
  %v39 = vlaneseq
  %v40 = vshrl.u32 %v39, 7
  %v41 = vsub.s32 0, %v40
  %v42 = vrot.slane %v37, %v41
  %vm44 = vcmask 261120
  %v46 = vsel %vm44, %v29, 0
  %v49 = vsel %vm44, %v30, 0
  %v52 = vsel %vm44, %v31, 0
  %v55 = vsel %vm44, %v32, 0
  %57 = vmatprep.subr.mxu0 0.0
  %58 = vmatpush1.msra.mxu0 %v33
  %59 = vmatprep.subr.mxu0 0.0
  %60 = vmatpush1.msra.mxu0 %v34
  %61 = vmatprep.subr.mxu0 0.0
  %62 = vmatpush1.msra.mxu0 %v35
  %63 = vmatprep.subr.mxu0 0.0
  %64 = vmatpush1.msra.mxu0 %v36
  %65 = vmatprep.subr.mxu0 0.0
  %66 = vmatpush1.msra.mxu0 0.0
  %67 = vmatprep.subr.mxu0 0.0
  %68 = vmatpush1.msra.mxu0 0.0
  %69 = vmatprep.subr.mxu0 0.0
  %70 = vmatpush1.msra.mxu0 0.0
  %71 = vmatprep.subr.mxu0 0.0
  %72 = vmatpush1.msra.mxu0 0.0
  %73 = vmatprep.subr.mxu0 0.0
  %74 = vmatpush1.msra.mxu0 0.0
  %75 = vmatprep.subr.mxu0 0.0
  %76 = vmatpush1.msra.mxu0 0.0
  %77 = vmatprep.subr.mxu0 0.0
  %78 = vmatpush1.msra.mxu0 0.0
  %79 = vmatprep.subr.mxu0 0.0
  %80 = vmatpush1.msra.mxu0 0.0
  %81 = vmatprep.subr.mxu0 0.0
  %82 = vmatpush1.msra.mxu0 0.0
  %83 = vmatprep.subr.mxu0 0.0
  %84 = vmatpush1.msra.mxu0 0.0
  %85 = vmatprep.subr.mxu0 0.0
  %86 = vmatpush1.msra.mxu0 0.0
  %87 = vmatprep.subr.mxu0 0.0
  %88 = vmatpush1.msra.mxu0 0.0
  %89 = vmatprep.subr.mxu0 0.0
  %90 = vmatpush1.msra.mxu0 0.0
  %91 = vmatprep.subr.mxu0 0.0
  %92 = vmatpush1.msra.mxu0 0.0
  %93 = vmatprep.subr.mxu0 0.0
  %94 = vmatpush1.msra.mxu0 0.0
  %95 = vmatprep.subr.mxu0 0.0
  %96 = vmatpush1.msra.mxu0 0.0
  %97 = vmatprep.subr.mxu0 0.0
  %98 = vmatpush1.msra.mxu0 0.0
  %99 = vmatprep.subr.mxu0 0.0
  %100 = vmatpush1.msra.mxu0 0.0
  %101 = vmatprep.subr.mxu0 0.0
  %102 = vmatpush1.msra.mxu0 0.0
  %103 = vmatprep.subr.mxu0 0.0
  %104 = vmatpush1.msra.mxu0 0.0
  %105 = vmatprep.subr.mxu0 0.0
  %106 = vmatpush1.msra.mxu0 0.0
  %107 = vmatprep.subr.mxu0 0.0
  %108 = vmatpush1.msra.mxu0 0.0
  %109 = vmatprep.subr.mxu0 0.0
  %110 = vmatpush1.msra.mxu0 0.0
  %111 = vmatprep.subr.mxu0 0.0
  %112 = vmatpush1.msra.mxu0 0.0
  %113 = vmatprep.subr.mxu0 0.0
  %114 = vmatpush1.msra.mxu0 0.0
  %115 = vmatprep.subr.mxu0 0.0
  %116 = vmatpush1.msra.mxu0 0.0
  %117 = vmatprep.subr.mxu0 0.0
  %118 = vmatpush1.msra.mxu0 0.0
  %119 = vmatprep.subr.mxu0 0.0
  %120 = vmatpush1.msra.mxu0 0.0
  %121 = vmatprep.mubr.f32.mxu0 0.0
  %122 = vmatmul.mubr.f32.gmra.mrb[0].mxu0 %v46
  %v123 = vpop.f32.mrb[0].mxu0
  %v124 = vadd.f32 %v42, %v123
  %v125 = vpop.f32.mrb[0].mxu0
  %126 = vmatprep.mubr.f32.mxu0 0.0
  %127 = vmatmul.mubr.f32.gmra.mrb[0].mxu0 %v49
  %v128 = vpop.f32.mrb[0].mxu0
  %v129 = vadd.f32 %v42, %v128
  %v130 = vpop.f32.mrb[0].mxu0
  %131 = vmatprep.mubr.f32.mxu0 0.0
  %132 = vmatmul.mubr.f32.gmra.mrb[0].mxu0 %v52
  %v133 = vpop.f32.mrb[0].mxu0
  %v134 = vadd.f32 %v42, %v133
  %v135 = vpop.f32.mrb[0].mxu0
  %136 = vmatprep.mubr.f32.mxu0 0.0
  %137 = vmatmul.mubr.f32.gmra.mrb[0].mxu0 %v55
  %v138 = vpop.f32.mrb[0].mxu0
  %v139 = vadd.f32 %v42, %v138
  %v140 = vpop.f32.mrb[0].mxu0
  %141 = vdwg.mxu0
  %v142 = vld [vmem:[%s2] sm:$0xff]
  %v143 = vld [vmem:[%s2 + $0x8] sm:$0xff]
  %v144 = vld [vmem:[%s2 + $0x10] sm:$0xff]
  %v145 = vld [vmem:[%s2 + $0x18] sm:$0xff]
  %v146 = vld [vmem:[%s4] sm:$0xff]
  %v147 = vld [vmem:[%s4 + $0x8] sm:$0xff]
  %v148 = vld [vmem:[%s4 + $0x10] sm:$0xff]
  %v149 = vld [vmem:[%s4 + $0x18] sm:$0xff]
  %v150 = vld [vmem:[%s4 + $0x20] sm:$0xff]
  %v151 = vld [vmem:[%s4 + $0x28] sm:$0xff]
  %v152 = vld [vmem:[%s4 + $0x30] sm:$0xff]
  %v153 = vld [vmem:[%s4 + $0x38] sm:$0xff]
  %v154 = vld [vmem:[%s5] sm:$0x1]
  %v156 = vsel %vm44, 0.0, 0
  %158 = vmatprep.subr.mxu0 0.0
  %159 = vmatpush1.msra.mxu0 %v142
  %160 = vmatprep.subr.mxu0 0.0
  %161 = vmatpush1.msra.mxu0 %v143
  %162 = vmatprep.subr.mxu0 0.0
  %163 = vmatpush1.msra.mxu0 %v144
  %164 = vmatprep.subr.mxu0 0.0
  %165 = vmatpush1.msra.mxu0 %v145
  %166 = vmatprep.subr.mxu0 0.0
  %167 = vmatpush1.msra.mxu0 0.0
  %168 = vmatprep.subr.mxu0 0.0
  %169 = vmatpush1.msra.mxu0 0.0
  %170 = vmatprep.subr.mxu0 0.0
  %171 = vmatpush1.msra.mxu0 0.0
  %172 = vmatprep.subr.mxu0 0.0
  %173 = vmatpush1.msra.mxu0 0.0
  %174 = vmatprep.subr.mxu0 0.0
  %175 = vmatpush1.msra.mxu0 0.0
  %176 = vmatprep.subr.mxu0 0.0
  %177 = vmatpush1.msra.mxu0 0.0
  %178 = vmatprep.subr.mxu0 0.0
  %179 = vmatpush1.msra.mxu0 0.0
  %180 = vmatprep.subr.mxu0 0.0
  %181 = vmatpush1.msra.mxu0 0.0
  %182 = vmatprep.subr.mxu0 0.0
  %183 = vmatpush1.msra.mxu0 0.0
  %184 = vmatprep.subr.mxu0 0.0
  %185 = vmatpush1.msra.mxu0 0.0
  %186 = vmatprep.subr.mxu0 0.0
  %187 = vmatpush1.msra.mxu0 0.0
  %188 = vmatprep.subr.mxu0 0.0
  %189 = vmatpush1.msra.mxu0 0.0
  %190 = vmatprep.subr.mxu0 0.0
  %191 = vmatpush1.msra.mxu0 0.0
  %192 = vmatprep.subr.mxu0 0.0
  %193 = vmatpush1.msra.mxu0 0.0
  %194 = vmatprep.subr.mxu0 0.0
  %195 = vmatpush1.msra.mxu0 0.0
  %196 = vmatprep.subr.mxu0 0.0
  %197 = vmatpush1.msra.mxu0 0.0
  %198 = vmatprep.subr.mxu0 0.0
  %199 = vmatpush1.msra.mxu0 0.0
  %200 = vmatprep.subr.mxu0 0.0
  %201 = vmatpush1.msra.mxu0 0.0
  %202 = vmatprep.subr.mxu0 0.0
  %203 = vmatpush1.msra.mxu0 0.0
  %204 = vmatprep.subr.mxu0 0.0
  %205 = vmatpush1.msra.mxu0 0.0
  %206 = vmatprep.subr.mxu0 0.0
  %207 = vmatpush1.msra.mxu0 0.0
  %208 = vmatprep.subr.mxu0 0.0
  %209 = vmatpush1.msra.mxu0 0.0
  %210 = vmatprep.subr.mxu0 0.0
  %211 = vmatpush1.msra.mxu0 0.0
  %212 = vmatprep.subr.mxu0 0.0
  %213 = vmatpush1.msra.mxu0 0.0
  %214 = vmatprep.subr.mxu0 0.0
  %215 = vmatpush1.msra.mxu0 0.0
  %216 = vmatprep.subr.mxu0 0.0
  %217 = vmatpush1.msra.mxu0 0.0
  %218 = vmatprep.subr.mxu0 0.0
  %219 = vmatpush1.msra.mxu0 0.0
  %220 = vmatprep.subr.mxu0 0.0
  %221 = vmatpush1.msra.mxu0 0.0
  %222 = vmatprep.mubr.f32.mxu0 0.0
  %223 = vmatmul.mubr.f32.gmra.mrb[0].mxu0 %v156
  %v224 = vpop.f32.mrb[0].mxu0
  %v225 = vadd.f32 0.0, %v224
  %v226 = vpop.f32.mrb[0].mxu0
  %227 = vdwg.mxu0
  %v228 = vadd.f32 %v124, %v225
  %v229 = vtanh.pop %v228
  %v230 = vsel %vm44, %v229, 0.0
  %v232 = vlaneseq
  %v233 = vshrl.u32 %v232, 7
  %v234 = vsub.s32 0, %v233
  %v235 = vrot.slane %v154, %v234
  %vm237 = vcmask 523264
  %v239 = vsel %vm237, %v230, 0
  %241 = vmatprep.subr.mxu0 0.0
  %242 = vmatpush1.msra.mxu0 %v146
  %243 = vmatprep.subr.mxu0 0.0
  %244 = vmatpush1.msra.mxu0 %v147
  %245 = vmatprep.subr.mxu0 0.0
  %246 = vmatpush1.msra.mxu0 %v148
  %247 = vmatprep.subr.mxu0 0.0
  %248 = vmatpush1.msra.mxu0 %v149
  %249 = vmatprep.subr.mxu0 0.0
  %250 = vmatpush1.msra.mxu0 %v150
  %251 = vmatprep.subr.mxu0 0.0
  %252 = vmatpush1.msra.mxu0 %v151
  %253 = vmatprep.subr.mxu0 0.0
  %254 = vmatpush1.msra.mxu0 %v152
  %255 = vmatprep.subr.mxu0 0.0
  %256 = vmatpush1.msra.mxu0 %v153
  %257 = vmatprep.subr.mxu0 0.0
  %258 = vmatpush1.msra.mxu0 0.0
  %259 = vmatprep.subr.mxu0 0.0
  %260 = vmatpush1.msra.mxu0 0.0
  %261 = vmatprep.subr.mxu0 0.0
  %262 = vmatpush1.msra.mxu0 0.0
  %263 = vmatprep.subr.mxu0 0.0
  %264 = vmatpush1.msra.mxu0 0.0
  %265 = vmatprep.subr.mxu0 0.0
  %266 = vmatpush1.msra.mxu0 0.0
  %267 = vmatprep.subr.mxu0 0.0
  %268 = vmatpush1.msra.mxu0 0.0
  %269 = vmatprep.subr.mxu0 0.0
  %270 = vmatpush1.msra.mxu0 0.0
  %271 = vmatprep.subr.mxu0 0.0
  %272 = vmatpush1.msra.mxu0 0.0
  %273 = vmatprep.subr.mxu0 0.0
  %274 = vmatpush1.msra.mxu0 0.0
  %275 = vmatprep.subr.mxu0 0.0
  %276 = vmatpush1.msra.mxu0 0.0
  %277 = vmatprep.subr.mxu0 0.0
  %278 = vmatpush1.msra.mxu0 0.0
  %279 = vmatprep.subr.mxu0 0.0
  %280 = vmatpush1.msra.mxu0 0.0
  %281 = vmatprep.subr.mxu0 0.0
  %282 = vmatpush1.msra.mxu0 0.0
  %283 = vmatprep.subr.mxu0 0.0
  %284 = vmatpush1.msra.mxu0 0.0
  %285 = vmatprep.subr.mxu0 0.0
  %286 = vmatpush1.msra.mxu0 0.0
  %287 = vmatprep.subr.mxu0 0.0
  %288 = vmatpush1.msra.mxu0 0.0
  %289 = vmatprep.subr.mxu0 0.0
  %290 = vmatpush1.msra.mxu0 0.0
  %291 = vmatprep.subr.mxu0 0.0
  %292 = vmatpush1.msra.mxu0 0.0
  %293 = vmatprep.subr.mxu0 0.0
  %294 = vmatpush1.msra.mxu0 0.0
  %295 = vmatprep.subr.mxu0 0.0
  %296 = vmatpush1.msra.mxu0 0.0
  %297 = vmatprep.subr.mxu0 0.0
  %298 = vmatpush1.msra.mxu0 0.0
  %299 = vmatprep.subr.mxu0 0.0
  %300 = vmatpush1.msra.mxu0 0.0
  %301 = vmatprep.subr.mxu0 0.0
  %302 = vmatpush1.msra.mxu0 0.0
  %303 = vmatprep.subr.mxu0 0.0
  %304 = vmatpush1.msra.mxu0 0.0
  %305 = vmatprep.mubr.f32.mxu0 0.0
  %306 = vmatmul.mubr.f32.gmra.mrb[0].mxu0 %v239
  %v307 = vpop.f32.mrb[0].mxu0
  %v308 = vadd.f32 %v235, %v307
  %v309 = vpop.f32.mrb[0].mxu0
  %310 = vdwg.mxu0
  %v311 = vtanh.pop %v308
  %v313 = vsel %vm44, %v229, 0
  %315 = vmatprep.subr.mxu0 0.0
  %316 = vmatpush1.msra.mxu0 %v142
  %317 = vmatprep.subr.mxu0 0.0
  %318 = vmatpush1.msra.mxu0 %v143
  %319 = vmatprep.subr.mxu0 0.0
  %320 = vmatpush1.msra.mxu0 %v144
  %321 = vmatprep.subr.mxu0 0.0
  %322 = vmatpush1.msra.mxu0 %v145
  %323 = vmatprep.subr.mxu0 0.0
  %324 = vmatpush1.msra.mxu0 0.0
  %325 = vmatprep.subr.mxu0 0.0
  %326 = vmatpush1.msra.mxu0 0.0
  %327 = vmatprep.subr.mxu0 0.0
  %328 = vmatpush1.msra.mxu0 0.0
  %329 = vmatprep.subr.mxu0 0.0
  %330 = vmatpush1.msra.mxu0 0.0
  %331 = vmatprep.subr.mxu0 0.0
  %332 = vmatpush1.msra.mxu0 0.0
  %333 = vmatprep.subr.mxu0 0.0
  %334 = vmatpush1.msra.mxu0 0.0
  %335 = vmatprep.subr.mxu0 0.0
  %336 = vmatpush1.msra.mxu0 0.0
  %337 = vmatprep.subr.mxu0 0.0
  %338 = vmatpush1.msra.mxu0 0.0
  %339 = vmatprep.subr.mxu0 0.0
  %340 = vmatpush1.msra.mxu0 0.0
  %341 = vmatprep.subr.mxu0 0.0
  %342 = vmatpush1.msra.mxu0 0.0
  %343 = vmatprep.subr.mxu0 0.0
  %344 = vmatpush1.msra.mxu0 0.0
  %345 = vmatprep.subr.mxu0 0.0
  %346 = vmatpush1.msra.mxu0 0.0
  %347 = vmatprep.subr.mxu0 0.0
  %348 = vmatpush1.msra.mxu0 0.0
  %349 = vmatprep.subr.mxu0 0.0
  %350 = vmatpush1.msra.mxu0 0.0
  %351 = vmatprep.subr.mxu0 0.0
  %352 = vmatpush1.msra.mxu0 0.0
  %353 = vmatprep.subr.mxu0 0.0
  %354 = vmatpush1.msra.mxu0 0.0
  %355 = vmatprep.subr.mxu0 0.0
  %356 = vmatpush1.msra.mxu0 0.0
  %357 = vmatprep.subr.mxu0 0.0
  %358 = vmatpush1.msra.mxu0 0.0
  %359 = vmatprep.subr.mxu0 0.0
  %360 = vmatpush1.msra.mxu0 0.0
  %361 = vmatprep.subr.mxu0 0.0
  %362 = vmatpush1.msra.mxu0 0.0
  %363 = vmatprep.subr.mxu0 0.0
  %364 = vmatpush1.msra.mxu0 0.0
  %365 = vmatprep.subr.mxu0 0.0
  %366 = vmatpush1.msra.mxu0 0.0
  %367 = vmatprep.subr.mxu0 0.0
  %368 = vmatpush1.msra.mxu0 0.0
  %369 = vmatprep.subr.mxu0 0.0
  %370 = vmatpush1.msra.mxu0 0.0
  %371 = vmatprep.subr.mxu0 0.0
  %372 = vmatpush1.msra.mxu0 0.0
  %373 = vmatprep.subr.mxu0 0.0
  %374 = vmatpush1.msra.mxu0 0.0
  %375 = vmatprep.subr.mxu0 0.0
  %376 = vmatpush1.msra.mxu0 0.0
  %377 = vmatprep.subr.mxu0 0.0
  %378 = vmatpush1.msra.mxu0 0.0
  %379 = vmatprep.mubr.f32.mxu0 0.0
  %380 = vmatmul.mubr.f32.gmra.mrb[0].mxu0 %v313
  %v381 = vpop.f32.mrb[0].mxu0
  %v382 = vadd.f32 0.0, %v381
  %v383 = vpop.f32.mrb[0].mxu0
  %384 = vdwg.mxu0
  %v386 = vrot.slane %v382, 4
  %v388 = vadd.f32 %v124, %v386
  %v389 = vtanh.pop %v388
  %v391 = vrot.slane %v311, 4
  %392 = vrot.lane.b32.xlu0 %v391, 32
  %v393 = vpop.permute.xlu0 %392
  %v395 = vsel %vm44, %v389, %v393
  %v397 = vrot.slane %v395, 4
  %v398 = vsel %vm237, %v397, 0
  %400 = vmatprep.subr.mxu0 0.0
  %401 = vmatpush1.msra.mxu0 %v146
  %402 = vmatprep.subr.mxu0 0.0
  %403 = vmatpush1.msra.mxu0 %v147
  %404 = vmatprep.subr.mxu0 0.0
  %405 = vmatpush1.msra.mxu0 %v148
  %406 = vmatprep.subr.mxu0 0.0
  %407 = vmatpush1.msra.mxu0 %v149
  %408 = vmatprep.subr.mxu0 0.0
  %409 = vmatpush1.msra.mxu0 %v150
  %410 = vmatprep.subr.mxu0 0.0
  %411 = vmatpush1.msra.mxu0 %v151
  %412 = vmatprep.subr.mxu0 0.0
  %413 = vmatpush1.msra.mxu0 %v152
  %414 = vmatprep.subr.mxu0 0.0
  %415 = vmatpush1.msra.mxu0 %v153
  %416 = vmatprep.subr.mxu0 0.0
  %417 = vmatpush1.msra.mxu0 0.0
  %418 = vmatprep.subr.mxu0 0.0
  %419 = vmatpush1.msra.mxu0 0.0
  %420 = vmatprep.subr.mxu0 0.0
  %421 = vmatpush1.msra.mxu0 0.0
  %422 = vmatprep.subr.mxu0 0.0
  %423 = vmatpush1.msra.mxu0 0.0
  %424 = vmatprep.subr.mxu0 0.0
  %425 = vmatpush1.msra.mxu0 0.0
  %426 = vmatprep.subr.mxu0 0.0
  %427 = vmatpush1.msra.mxu0 0.0
  %428 = vmatprep.subr.mxu0 0.0
  %429 = vmatpush1.msra.mxu0 0.0
  %430 = vmatprep.subr.mxu0 0.0
  %431 = vmatpush1.msra.mxu0 0.0
  %432 = vmatprep.subr.mxu0 0.0
  %433 = vmatpush1.msra.mxu0 0.0
  %434 = vmatprep.subr.mxu0 0.0
  %435 = vmatpush1.msra.mxu0 0.0
  %436 = vmatprep.subr.mxu0 0.0
  %437 = vmatpush1.msra.mxu0 0.0
  %438 = vmatprep.subr.mxu0 0.0
  %439 = vmatpush1.msra.mxu0 0.0
  %440 = vmatprep.subr.mxu0 0.0
  %441 = vmatpush1.msra.mxu0 0.0
  %442 = vmatprep.subr.mxu0 0.0
  %443 = vmatpush1.msra.mxu0 0.0
  %444 = vmatprep.subr.mxu0 0.0
  %445 = vmatpush1.msra.mxu0 0.0
  %446 = vmatprep.subr.mxu0 0.0
  %447 = vmatpush1.msra.mxu0 0.0
  %448 = vmatprep.subr.mxu0 0.0
  %449 = vmatpush1.msra.mxu0 0.0
  %450 = vmatprep.subr.mxu0 0.0
  %451 = vmatpush1.msra.mxu0 0.0
  %452 = vmatprep.subr.mxu0 0.0
  %453 = vmatpush1.msra.mxu0 0.0
  %454 = vmatprep.subr.mxu0 0.0
  %455 = vmatpush1.msra.mxu0 0.0
  %456 = vmatprep.subr.mxu0 0.0
  %457 = vmatpush1.msra.mxu0 0.0
  %458 = vmatprep.subr.mxu0 0.0
  %459 = vmatpush1.msra.mxu0 0.0
  %460 = vmatprep.subr.mxu0 0.0
  %461 = vmatpush1.msra.mxu0 0.0
  %462 = vmatprep.subr.mxu0 0.0
  %463 = vmatpush1.msra.mxu0 0.0
  %464 = vmatprep.mubr.f32.mxu0 0.0
  %465 = vmatmul.mubr.f32.gmra.mrb[0].mxu0 %v398
  %v466 = vpop.f32.mrb[0].mxu0
  %v467 = vadd.f32 %v235, %v466
  %v468 = vpop.f32.mrb[0].mxu0
  %469 = vdwg.mxu0
  %v470 = vtanh.pop %v467
  %v472 = vrot.slane %v389, 4
  %v473 = vsel %vm44, %v472, 0
  %475 = vmatprep.subr.mxu0 0.0
  %476 = vmatpush1.msra.mxu0 %v142
  %477 = vmatprep.subr.mxu0 0.0
  %478 = vmatpush1.msra.mxu0 %v143
  %479 = vmatprep.subr.mxu0 0.0
  %480 = vmatpush1.msra.mxu0 %v144
  %481 = vmatprep.subr.mxu0 0.0
  %482 = vmatpush1.msra.mxu0 %v145
  %483 = vmatprep.subr.mxu0 0.0
  %484 = vmatpush1.msra.mxu0 0.0
  %485 = vmatprep.subr.mxu0 0.0
  %486 = vmatpush1.msra.mxu0 0.0
  %487 = vmatprep.subr.mxu0 0.0
  %488 = vmatpush1.msra.mxu0 0.0
  %489 = vmatprep.subr.mxu0 0.0
  %490 = vmatpush1.msra.mxu0 0.0
  %491 = vmatprep.subr.mxu0 0.0
  %492 = vmatpush1.msra.mxu0 0.0
  %493 = vmatprep.subr.mxu0 0.0
  %494 = vmatpush1.msra.mxu0 0.0
  %495 = vmatprep.subr.mxu0 0.0
  %496 = vmatpush1.msra.mxu0 0.0
  %497 = vmatprep.subr.mxu0 0.0
  %498 = vmatpush1.msra.mxu0 0.0
  %499 = vmatprep.subr.mxu0 0.0
  %500 = vmatpush1.msra.mxu0 0.0
  %501 = vmatprep.subr.mxu0 0.0
  %502 = vmatpush1.msra.mxu0 0.0
  %503 = vmatprep.subr.mxu0 0.0
  %504 = vmatpush1.msra.mxu0 0.0
  %505 = vmatprep.subr.mxu0 0.0
  %506 = vmatpush1.msra.mxu0 0.0
  %507 = vmatprep.subr.mxu0 0.0
  %508 = vmatpush1.msra.mxu0 0.0
  %509 = vmatprep.subr.mxu0 0.0
  %510 = vmatpush1.msra.mxu0 0.0
  %511 = vmatprep.subr.mxu0 0.0
  %512 = vmatpush1.msra.mxu0 0.0
  %513 = vmatprep.subr.mxu0 0.0
  %514 = vmatpush1.msra.mxu0 0.0
  %515 = vmatprep.subr.mxu0 0.0
  %516 = vmatpush1.msra.mxu0 0.0
  %517 = vmatprep.subr.mxu0 0.0
  %518 = vmatpush1.msra.mxu0 0.0
  %519 = vmatprep.subr.mxu0 0.0
  %520 = vmatpush1.msra.mxu0 0.0
  %521 = vmatprep.subr.mxu0 0.0
  %522 = vmatpush1.msra.mxu0 0.0
  %523 = vmatprep.subr.mxu0 0.0
  %524 = vmatpush1.msra.mxu0 0.0
  %525 = vmatprep.subr.mxu0 0.0
  %526 = vmatpush1.msra.mxu0 0.0
  %527 = vmatprep.subr.mxu0 0.0
  %528 = vmatpush1.msra.mxu0 0.0
  %529 = vmatprep.subr.mxu0 0.0
  %530 = vmatpush1.msra.mxu0 0.0
  %531 = vmatprep.subr.mxu0 0.0
  %532 = vmatpush1.msra.mxu0 0.0
  %533 = vmatprep.subr.mxu0 0.0
  %534 = vmatpush1.msra.mxu0 0.0
  %535 = vmatprep.subr.mxu0 0.0
  %536 = vmatpush1.msra.mxu0 0.0
  %537 = vmatprep.subr.mxu0 0.0
  %538 = vmatpush1.msra.mxu0 0.0
  %539 = vmatprep.mubr.f32.mxu0 0.0
  %540 = vmatmul.mubr.f32.gmra.mrb[0].mxu0 %v473
  %v541 = vpop.f32.mrb[0].mxu0
  %v542 = vadd.f32 0.0, %v541
  %v543 = vpop.f32.mrb[0].mxu0
  %544 = vdwg.mxu0
  %v545 = vadd.f32 %v129, %v542
  %v546 = vtanh.pop %v545
  %548 = vrot.lane.b32.xlu0 %v470, 32
  %v549 = vpop.permute.xlu0 %548
  %v551 = vsel %vm44, %v546, %v549
  %v553 = vsel %vm237, %v551, 0
  %555 = vmatprep.subr.mxu0 0.0
  %556 = vmatpush1.msra.mxu0 %v146
  %557 = vmatprep.subr.mxu0 0.0
  %558 = vmatpush1.msra.mxu0 %v147
  %559 = vmatprep.subr.mxu0 0.0
  %560 = vmatpush1.msra.mxu0 %v148
  %561 = vmatprep.subr.mxu0 0.0
  %562 = vmatpush1.msra.mxu0 %v149
  %563 = vmatprep.subr.mxu0 0.0
  %564 = vmatpush1.msra.mxu0 %v150
  %565 = vmatprep.subr.mxu0 0.0
  %566 = vmatpush1.msra.mxu0 %v151
  %567 = vmatprep.subr.mxu0 0.0
  %568 = vmatpush1.msra.mxu0 %v152
  %569 = vmatprep.subr.mxu0 0.0
  %570 = vmatpush1.msra.mxu0 %v153
  %571 = vmatprep.subr.mxu0 0.0
  %572 = vmatpush1.msra.mxu0 0.0
  %573 = vmatprep.subr.mxu0 0.0
  %574 = vmatpush1.msra.mxu0 0.0
  %575 = vmatprep.subr.mxu0 0.0
  %576 = vmatpush1.msra.mxu0 0.0
  %577 = vmatprep.subr.mxu0 0.0
  %578 = vmatpush1.msra.mxu0 0.0
  %579 = vmatprep.subr.mxu0 0.0
  %580 = vmatpush1.msra.mxu0 0.0
  %581 = vmatprep.subr.mxu0 0.0
  %582 = vmatpush1.msra.mxu0 0.0
  %583 = vmatprep.subr.mxu0 0.0
  %584 = vmatpush1.msra.mxu0 0.0
  %585 = vmatprep.subr.mxu0 0.0
  %586 = vmatpush1.msra.mxu0 0.0
  %587 = vmatprep.subr.mxu0 0.0
  %588 = vmatpush1.msra.mxu0 0.0
  %589 = vmatprep.subr.mxu0 0.0
  %590 = vmatpush1.msra.mxu0 0.0
  %591 = vmatprep.subr.mxu0 0.0
  %592 = vmatpush1.msra.mxu0 0.0
  %593 = vmatprep.subr.mxu0 0.0
  %594 = vmatpush1.msra.mxu0 0.0
  %595 = vmatprep.subr.mxu0 0.0
  %596 = vmatpush1.msra.mxu0 0.0
  %597 = vmatprep.subr.mxu0 0.0
  %598 = vmatpush1.msra.mxu0 0.0
  %599 = vmatprep.subr.mxu0 0.0
  %600 = vmatpush1.msra.mxu0 0.0
  %601 = vmatprep.subr.mxu0 0.0
  %602 = vmatpush1.msra.mxu0 0.0
  %603 = vmatprep.subr.mxu0 0.0
  %604 = vmatpush1.msra.mxu0 0.0
  %605 = vmatprep.subr.mxu0 0.0
  %606 = vmatpush1.msra.mxu0 0.0
  %607 = vmatprep.subr.mxu0 0.0
  %608 = vmatpush1.msra.mxu0 0.0
  %609 = vmatprep.subr.mxu0 0.0
  %610 = vmatpush1.msra.mxu0 0.0
  %611 = vmatprep.subr.mxu0 0.0
  %612 = vmatpush1.msra.mxu0 0.0
  %613 = vmatprep.subr.mxu0 0.0
  %614 = vmatpush1.msra.mxu0 0.0
  %615 = vmatprep.subr.mxu0 0.0
  %616 = vmatpush1.msra.mxu0 0.0
  %617 = vmatprep.subr.mxu0 0.0
  %618 = vmatpush1.msra.mxu0 0.0
  %619 = vmatprep.mubr.f32.mxu0 0.0
  %620 = vmatmul.mubr.f32.gmra.mrb[0].mxu0 %v553
  %v621 = vpop.f32.mrb[0].mxu0
  %v622 = vadd.f32 %v235, %v621
  %v623 = vpop.f32.mrb[0].mxu0
  %624 = vdwg.mxu0
  %v625 = vtanh.pop %v622
  %v627 = vsel %vm44, %v546, 0
  %629 = vmatprep.subr.mxu0 0.0
  %630 = vmatpush1.msra.mxu0 %v142
  %631 = vmatprep.subr.mxu0 0.0
  %632 = vmatpush1.msra.mxu0 %v143
  %633 = vmatprep.subr.mxu0 0.0
  %634 = vmatpush1.msra.mxu0 %v144
  %635 = vmatprep.subr.mxu0 0.0
  %636 = vmatpush1.msra.mxu0 %v145
  %637 = vmatprep.subr.mxu0 0.0
  %638 = vmatpush1.msra.mxu0 0.0
  %639 = vmatprep.subr.mxu0 0.0
  %640 = vmatpush1.msra.mxu0 0.0
  %641 = vmatprep.subr.mxu0 0.0
  %642 = vmatpush1.msra.mxu0 0.0
  %643 = vmatprep.subr.mxu0 0.0
  %644 = vmatpush1.msra.mxu0 0.0
  %645 = vmatprep.subr.mxu0 0.0
  %646 = vmatpush1.msra.mxu0 0.0
  %647 = vmatprep.subr.mxu0 0.0
  %648 = vmatpush1.msra.mxu0 0.0
  %649 = vmatprep.subr.mxu0 0.0
  %650 = vmatpush1.msra.mxu0 0.0
  %651 = vmatprep.subr.mxu0 0.0
  %652 = vmatpush1.msra.mxu0 0.0
  %653 = vmatprep.subr.mxu0 0.0
  %654 = vmatpush1.msra.mxu0 0.0
  %655 = vmatprep.subr.mxu0 0.0
  %656 = vmatpush1.msra.mxu0 0.0
  %657 = vmatprep.subr.mxu0 0.0
  %658 = vmatpush1.msra.mxu0 0.0
  %659 = vmatprep.subr.mxu0 0.0
  %660 = vmatpush1.msra.mxu0 0.0
  %661 = vmatprep.subr.mxu0 0.0
  %662 = vmatpush1.msra.mxu0 0.0
  %663 = vmatprep.subr.mxu0 0.0
  %664 = vmatpush1.msra.mxu0 0.0
  %665 = vmatprep.subr.mxu0 0.0
  %666 = vmatpush1.msra.mxu0 0.0
  %667 = vmatprep.subr.mxu0 0.0
  %668 = vmatpush1.msra.mxu0 0.0
  %669 = vmatprep.subr.mxu0 0.0
  %670 = vmatpush1.msra.mxu0 0.0
  %671 = vmatprep.subr.mxu0 0.0
  %672 = vmatpush1.msra.mxu0 0.0
  %673 = vmatprep.subr.mxu0 0.0
  %674 = vmatpush1.msra.mxu0 0.0
  %675 = vmatprep.subr.mxu0 0.0
  %676 = vmatpush1.msra.mxu0 0.0
  %677 = vmatprep.subr.mxu0 0.0
  %678 = vmatpush1.msra.mxu0 0.0
  %679 = vmatprep.subr.mxu0 0.0
  %680 = vmatpush1.msra.mxu0 0.0
  %681 = vmatprep.subr.mxu0 0.0
  %682 = vmatpush1.msra.mxu0 0.0
  %683 = vmatprep.subr.mxu0 0.0
  %684 = vmatpush1.msra.mxu0 0.0
  %685 = vmatprep.subr.mxu0 0.0
  %686 = vmatpush1.msra.mxu0 0.0
  %687 = vmatprep.subr.mxu0 0.0
  %688 = vmatpush1.msra.mxu0 0.0
  %689 = vmatprep.subr.mxu0 0.0
  %690 = vmatpush1.msra.mxu0 0.0
  %691 = vmatprep.subr.mxu0 0.0
  %692 = vmatpush1.msra.mxu0 0.0
  %693 = vmatprep.mubr.f32.mxu0 0.0
  %694 = vmatmul.mubr.f32.gmra.mrb[0].mxu0 %v627
  %v695 = vpop.f32.mrb[0].mxu0
  %v696 = vadd.f32 0.0, %v695
  %v697 = vpop.f32.mrb[0].mxu0
  %698 = vdwg.mxu0
  %v700 = vrot.slane %v696, 4
  %v702 = vadd.f32 %v129, %v700
  %v703 = vtanh.pop %v702
  %v705 = vrot.slane %v625, 4
  %706 = vrot.lane.b32.xlu0 %v705, 32
  %v707 = vpop.permute.xlu0 %706
  %v709 = vsel %vm44, %v703, %v707
  %v711 = vrot.slane %v709, 4
  %v712 = vsel %vm237, %v711, 0
  %714 = vmatprep.subr.mxu0 0.0
  %715 = vmatpush1.msra.mxu0 %v146
  %716 = vmatprep.subr.mxu0 0.0
  %717 = vmatpush1.msra.mxu0 %v147
  %718 = vmatprep.subr.mxu0 0.0
  %719 = vmatpush1.msra.mxu0 %v148
  %720 = vmatprep.subr.mxu0 0.0
  %721 = vmatpush1.msra.mxu0 %v149
  %722 = vmatprep.subr.mxu0 0.0
  %723 = vmatpush1.msra.mxu0 %v150
  %724 = vmatprep.subr.mxu0 0.0
  %725 = vmatpush1.msra.mxu0 %v151
  %726 = vmatprep.subr.mxu0 0.0
  %727 = vmatpush1.msra.mxu0 %v152
  %728 = vmatprep.subr.mxu0 0.0
  %729 = vmatpush1.msra.mxu0 %v153
  %730 = vmatprep.subr.mxu0 0.0
  %731 = vmatpush1.msra.mxu0 0.0
  %732 = vmatprep.subr.mxu0 0.0
  %733 = vmatpush1.msra.mxu0 0.0
  %734 = vmatprep.subr.mxu0 0.0
  %735 = vmatpush1.msra.mxu0 0.0
  %736 = vmatprep.subr.mxu0 0.0
  %737 = vmatpush1.msra.mxu0 0.0
  %738 = vmatprep.subr.mxu0 0.0
  %739 = vmatpush1.msra.mxu0 0.0
  %740 = vmatprep.subr.mxu0 0.0
  %741 = vmatpush1.msra.mxu0 0.0
  %742 = vmatprep.subr.mxu0 0.0
  %743 = vmatpush1.msra.mxu0 0.0
  %744 = vmatprep.subr.mxu0 0.0
  %745 = vmatpush1.msra.mxu0 0.0
  %746 = vmatprep.subr.mxu0 0.0
  %747 = vmatpush1.msra.mxu0 0.0
  %748 = vmatprep.subr.mxu0 0.0
  %749 = vmatpush1.msra.mxu0 0.0
  %750 = vmatprep.subr.mxu0 0.0
  %751 = vmatpush1.msra.mxu0 0.0
  %752 = vmatprep.subr.mxu0 0.0
  %753 = vmatpush1.msra.mxu0 0.0
  %754 = vmatprep.subr.mxu0 0.0
  %755 = vmatpush1.msra.mxu0 0.0
  %756 = vmatprep.subr.mxu0 0.0
  %757 = vmatpush1.msra.mxu0 0.0
  %758 = vmatprep.subr.mxu0 0.0
  %759 = vmatpush1.msra.mxu0 0.0
  %760 = vmatprep.subr.mxu0 0.0
  %761 = vmatpush1.msra.mxu0 0.0
  %762 = vmatprep.subr.mxu0 0.0
  %763 = vmatpush1.msra.mxu0 0.0
  %764 = vmatprep.subr.mxu0 0.0
  %765 = vmatpush1.msra.mxu0 0.0
  %766 = vmatprep.subr.mxu0 0.0
  %767 = vmatpush1.msra.mxu0 0.0
  %768 = vmatprep.subr.mxu0 0.0
  %769 = vmatpush1.msra.mxu0 0.0
  %770 = vmatprep.subr.mxu0 0.0
  %771 = vmatpush1.msra.mxu0 0.0
  %772 = vmatprep.subr.mxu0 0.0
  %773 = vmatpush1.msra.mxu0 0.0
  %774 = vmatprep.subr.mxu0 0.0
  %775 = vmatpush1.msra.mxu0 0.0
  %776 = vmatprep.subr.mxu0 0.0
  %777 = vmatpush1.msra.mxu0 0.0
  %778 = vmatprep.mubr.f32.mxu0 0.0
  %779 = vmatmul.mubr.f32.gmra.mrb[0].mxu0 %v712
  %v780 = vpop.f32.mrb[0].mxu0
  %v781 = vadd.f32 %v235, %v780
  %v782 = vpop.f32.mrb[0].mxu0
  %783 = vdwg.mxu0
  %v784 = vtanh.pop %v781
  %v786 = vrot.slane %v703, 4
  %v787 = vsel %vm44, %v786, 0
  %789 = vmatprep.subr.mxu0 0.0
  %790 = vmatpush1.msra.mxu0 %v142
  %791 = vmatprep.subr.mxu0 0.0
  %792 = vmatpush1.msra.mxu0 %v143
  %793 = vmatprep.subr.mxu0 0.0
  %794 = vmatpush1.msra.mxu0 %v144
  %795 = vmatprep.subr.mxu0 0.0
  %796 = vmatpush1.msra.mxu0 %v145
  %797 = vmatprep.subr.mxu0 0.0
  %798 = vmatpush1.msra.mxu0 0.0
  %799 = vmatprep.subr.mxu0 0.0
  %800 = vmatpush1.msra.mxu0 0.0
  %801 = vmatprep.subr.mxu0 0.0
  %802 = vmatpush1.msra.mxu0 0.0
  %803 = vmatprep.subr.mxu0 0.0
  %804 = vmatpush1.msra.mxu0 0.0
  %805 = vmatprep.subr.mxu0 0.0
  %806 = vmatpush1.msra.mxu0 0.0
  %807 = vmatprep.subr.mxu0 0.0
  %808 = vmatpush1.msra.mxu0 0.0
  %809 = vmatprep.subr.mxu0 0.0
  %810 = vmatpush1.msra.mxu0 0.0
  %811 = vmatprep.subr.mxu0 0.0
  %812 = vmatpush1.msra.mxu0 0.0
  %813 = vmatprep.subr.mxu0 0.0
  %814 = vmatpush1.msra.mxu0 0.0
  %815 = vmatprep.subr.mxu0 0.0
  %816 = vmatpush1.msra.mxu0 0.0
  %817 = vmatprep.subr.mxu0 0.0
  %818 = vmatpush1.msra.mxu0 0.0
  %819 = vmatprep.subr.mxu0 0.0
  %820 = vmatpush1.msra.mxu0 0.0
  %821 = vmatprep.subr.mxu0 0.0
  %822 = vmatpush1.msra.mxu0 0.0
  %823 = vmatprep.subr.mxu0 0.0
  %824 = vmatpush1.msra.mxu0 0.0
  %825 = vmatprep.subr.mxu0 0.0
  %826 = vmatpush1.msra.mxu0 0.0
  %827 = vmatprep.subr.mxu0 0.0
  %828 = vmatpush1.msra.mxu0 0.0
  %829 = vmatprep.subr.mxu0 0.0
  %830 = vmatpush1.msra.mxu0 0.0
  %831 = vmatprep.subr.mxu0 0.0
  %832 = vmatpush1.msra.mxu0 0.0
  %833 = vmatprep.subr.mxu0 0.0
  %834 = vmatpush1.msra.mxu0 0.0
  %835 = vmatprep.subr.mxu0 0.0
  %836 = vmatpush1.msra.mxu0 0.0
  %837 = vmatprep.subr.mxu0 0.0
  %838 = vmatpush1.msra.mxu0 0.0
  %839 = vmatprep.subr.mxu0 0.0
  %840 = vmatpush1.msra.mxu0 0.0
  %841 = vmatprep.subr.mxu0 0.0
  %842 = vmatpush1.msra.mxu0 0.0
  %843 = vmatprep.subr.mxu0 0.0
  %844 = vmatpush1.msra.mxu0 0.0
  %845 = vmatprep.subr.mxu0 0.0
  %846 = vmatpush1.msra.mxu0 0.0
  %847 = vmatprep.subr.mxu0 0.0
  %848 = vmatpush1.msra.mxu0 0.0
  %849 = vmatprep.subr.mxu0 0.0
  %850 = vmatpush1.msra.mxu0 0.0
  %851 = vmatprep.subr.mxu0 0.0
  %852 = vmatpush1.msra.mxu0 0.0
  %853 = vmatprep.mubr.f32.mxu0 0.0
  %854 = vmatmul.mubr.f32.gmra.mrb[0].mxu0 %v787
  %v855 = vpop.f32.mrb[0].mxu0
  %v856 = vadd.f32 0.0, %v855
  %v857 = vpop.f32.mrb[0].mxu0
  %858 = vdwg.mxu0
  %v859 = vadd.f32 %v134, %v856
  %v860 = vtanh.pop %v859
  %862 = vrot.lane.b32.xlu0 %v784, 32
  %v863 = vpop.permute.xlu0 %862
  %v865 = vsel %vm44, %v860, %v863
  %v867 = vsel %vm237, %v865, 0
  %869 = vmatprep.subr.mxu0 0.0
  %870 = vmatpush1.msra.mxu0 %v146
  %871 = vmatprep.subr.mxu0 0.0
  %872 = vmatpush1.msra.mxu0 %v147
  %873 = vmatprep.subr.mxu0 0.0
  %874 = vmatpush1.msra.mxu0 %v148
  %875 = vmatprep.subr.mxu0 0.0
  %876 = vmatpush1.msra.mxu0 %v149
  %877 = vmatprep.subr.mxu0 0.0
  %878 = vmatpush1.msra.mxu0 %v150
  %879 = vmatprep.subr.mxu0 0.0
  %880 = vmatpush1.msra.mxu0 %v151
  %881 = vmatprep.subr.mxu0 0.0
  %882 = vmatpush1.msra.mxu0 %v152
  %883 = vmatprep.subr.mxu0 0.0
  %884 = vmatpush1.msra.mxu0 %v153
  %885 = vmatprep.subr.mxu0 0.0
  %886 = vmatpush1.msra.mxu0 0.0
  %887 = vmatprep.subr.mxu0 0.0
  %888 = vmatpush1.msra.mxu0 0.0
  %889 = vmatprep.subr.mxu0 0.0
  %890 = vmatpush1.msra.mxu0 0.0
  %891 = vmatprep.subr.mxu0 0.0
  %892 = vmatpush1.msra.mxu0 0.0
  %893 = vmatprep.subr.mxu0 0.0
  %894 = vmatpush1.msra.mxu0 0.0
  %895 = vmatprep.subr.mxu0 0.0
  %896 = vmatpush1.msra.mxu0 0.0
  %897 = vmatprep.subr.mxu0 0.0
  %898 = vmatpush1.msra.mxu0 0.0
  %899 = vmatprep.subr.mxu0 0.0
  %900 = vmatpush1.msra.mxu0 0.0
  %901 = vmatprep.subr.mxu0 0.0
  %902 = vmatpush1.msra.mxu0 0.0
  %903 = vmatprep.subr.mxu0 0.0
  %904 = vmatpush1.msra.mxu0 0.0
  %905 = vmatprep.subr.mxu0 0.0
  %906 = vmatpush1.msra.mxu0 0.0
  %907 = vmatprep.subr.mxu0 0.0
  %908 = vmatpush1.msra.mxu0 0.0
  %909 = vmatprep.subr.mxu0 0.0
  %910 = vmatpush1.msra.mxu0 0.0
  %911 = vmatprep.subr.mxu0 0.0
  %912 = vmatpush1.msra.mxu0 0.0
  %913 = vmatprep.subr.mxu0 0.0
  %914 = vmatpush1.msra.mxu0 0.0
  %915 = vmatprep.subr.mxu0 0.0
  %916 = vmatpush1.msra.mxu0 0.0
  %917 = vmatprep.subr.mxu0 0.0
  %918 = vmatpush1.msra.mxu0 0.0
  %919 = vmatprep.subr.mxu0 0.0
  %920 = vmatpush1.msra.mxu0 0.0
  %921 = vmatprep.subr.mxu0 0.0
  %922 = vmatpush1.msra.mxu0 0.0
  %923 = vmatprep.subr.mxu0 0.0
  %924 = vmatpush1.msra.mxu0 0.0
  %925 = vmatprep.subr.mxu0 0.0
  %926 = vmatpush1.msra.mxu0 0.0
  %927 = vmatprep.subr.mxu0 0.0
  %928 = vmatpush1.msra.mxu0 0.0
  %929 = vmatprep.subr.mxu0 0.0
  %930 = vmatpush1.msra.mxu0 0.0
  %931 = vmatprep.subr.mxu0 0.0
  %932 = vmatpush1.msra.mxu0 0.0
  %933 = vmatprep.mubr.f32.mxu0 0.0
  %934 = vmatmul.mubr.f32.gmra.mrb[0].mxu0 %v867
  %v935 = vpop.f32.mrb[0].mxu0
  %v936 = vadd.f32 %v235, %v935
  %v937 = vpop.f32.mrb[0].mxu0
  %938 = vdwg.mxu0
  %v939 = vtanh.pop %v936
  %v941 = vsel %vm44, %v860, 0
  %943 = vmatprep.subr.mxu0 0.0
  %944 = vmatpush1.msra.mxu0 %v142
  %945 = vmatprep.subr.mxu0 0.0
  %946 = vmatpush1.msra.mxu0 %v143
  %947 = vmatprep.subr.mxu0 0.0
  %948 = vmatpush1.msra.mxu0 %v144
  %949 = vmatprep.subr.mxu0 0.0
  %950 = vmatpush1.msra.mxu0 %v145
  %951 = vmatprep.subr.mxu0 0.0
  %952 = vmatpush1.msra.mxu0 0.0
  %953 = vmatprep.subr.mxu0 0.0
  %954 = vmatpush1.msra.mxu0 0.0
  %955 = vmatprep.subr.mxu0 0.0
  %956 = vmatpush1.msra.mxu0 0.0
  %957 = vmatprep.subr.mxu0 0.0
  %958 = vmatpush1.msra.mxu0 0.0
  %959 = vmatprep.subr.mxu0 0.0
  %960 = vmatpush1.msra.mxu0 0.0
  %961 = vmatprep.subr.mxu0 0.0
  %962 = vmatpush1.msra.mxu0 0.0
  %963 = vmatprep.subr.mxu0 0.0
  %964 = vmatpush1.msra.mxu0 0.0
  %965 = vmatprep.subr.mxu0 0.0
  %966 = vmatpush1.msra.mxu0 0.0
  %967 = vmatprep.subr.mxu0 0.0
  %968 = vmatpush1.msra.mxu0 0.0
  %969 = vmatprep.subr.mxu0 0.0
  %970 = vmatpush1.msra.mxu0 0.0
  %971 = vmatprep.subr.mxu0 0.0
  %972 = vmatpush1.msra.mxu0 0.0
  %973 = vmatprep.subr.mxu0 0.0
  %974 = vmatpush1.msra.mxu0 0.0
  %975 = vmatprep.subr.mxu0 0.0
  %976 = vmatpush1.msra.mxu0 0.0
  %977 = vmatprep.subr.mxu0 0.0
  %978 = vmatpush1.msra.mxu0 0.0
  %979 = vmatprep.subr.mxu0 0.0
  %980 = vmatpush1.msra.mxu0 0.0
  %981 = vmatprep.subr.mxu0 0.0
  %982 = vmatpush1.msra.mxu0 0.0
  %983 = vmatprep.subr.mxu0 0.0
  %984 = vmatpush1.msra.mxu0 0.0
  %985 = vmatprep.subr.mxu0 0.0
  %986 = vmatpush1.msra.mxu0 0.0
  %987 = vmatprep.subr.mxu0 0.0
  %988 = vmatpush1.msra.mxu0 0.0
  %989 = vmatprep.subr.mxu0 0.0
  %990 = vmatpush1.msra.mxu0 0.0
  %991 = vmatprep.subr.mxu0 0.0
  %992 = vmatpush1.msra.mxu0 0.0
  %993 = vmatprep.subr.mxu0 0.0
  %994 = vmatpush1.msra.mxu0 0.0
  %995 = vmatprep.subr.mxu0 0.0
  %996 = vmatpush1.msra.mxu0 0.0
  %997 = vmatprep.subr.mxu0 0.0
  %998 = vmatpush1.msra.mxu0 0.0
  %999 = vmatprep.subr.mxu0 0.0
  %1000 = vmatpush1.msra.mxu0 0.0
  %1001 = vmatprep.subr.mxu0 0.0
  %1002 = vmatpush1.msra.mxu0 0.0
  %1003 = vmatprep.subr.mxu0 0.0
  %1004 = vmatpush1.msra.mxu0 0.0
  %1005 = vmatprep.subr.mxu0 0.0
  %1006 = vmatpush1.msra.mxu0 0.0
  %1007 = vmatprep.mubr.f32.mxu0 0.0
  %1008 = vmatmul.mubr.f32.gmra.mrb[0].mxu0 %v941
  %v1009 = vpop.f32.mrb[0].mxu0
  %v1010 = vadd.f32 0.0, %v1009
  %v1011 = vpop.f32.mrb[0].mxu0
  %1012 = vdwg.mxu0
  %v1014 = vrot.slane %v1010, 4
  %v1016 = vadd.f32 %v134, %v1014
  %v1017 = vtanh.pop %v1016
  %v1019 = vrot.slane %v939, 4
  %1020 = vrot.lane.b32.xlu0 %v1019, 32
  %v1021 = vpop.permute.xlu0 %1020
  %v1023 = vsel %vm44, %v1017, %v1021
  %v1025 = vrot.slane %v1023, 4
  %v1026 = vsel %vm237, %v1025, 0
  %1028 = vmatprep.subr.mxu0 0.0
  %1029 = vmatpush1.msra.mxu0 %v146
  %1030 = vmatprep.subr.mxu0 0.0
  %1031 = vmatpush1.msra.mxu0 %v147
  %1032 = vmatprep.subr.mxu0 0.0
  %1033 = vmatpush1.msra.mxu0 %v148
  %1034 = vmatprep.subr.mxu0 0.0
  %1035 = vmatpush1.msra.mxu0 %v149
  %1036 = vmatprep.subr.mxu0 0.0
  %1037 = vmatpush1.msra.mxu0 %v150
  %1038 = vmatprep.subr.mxu0 0.0
  %1039 = vmatpush1.msra.mxu0 %v151
  %1040 = vmatprep.subr.mxu0 0.0
  %1041 = vmatpush1.msra.mxu0 %v152
  %1042 = vmatprep.subr.mxu0 0.0
  %1043 = vmatpush1.msra.mxu0 %v153
  %1044 = vmatprep.subr.mxu0 0.0
  %1045 = vmatpush1.msra.mxu0 0.0
  %1046 = vmatprep.subr.mxu0 0.0
  %1047 = vmatpush1.msra.mxu0 0.0
  %1048 = vmatprep.subr.mxu0 0.0
  %1049 = vmatpush1.msra.mxu0 0.0
  %1050 = vmatprep.subr.mxu0 0.0
  %1051 = vmatpush1.msra.mxu0 0.0
  %1052 = vmatprep.subr.mxu0 0.0
  %1053 = vmatpush1.msra.mxu0 0.0
  %1054 = vmatprep.subr.mxu0 0.0
  %1055 = vmatpush1.msra.mxu0 0.0
  %1056 = vmatprep.subr.mxu0 0.0
  %1057 = vmatpush1.msra.mxu0 0.0
  %1058 = vmatprep.subr.mxu0 0.0
  %1059 = vmatpush1.msra.mxu0 0.0
  %1060 = vmatprep.subr.mxu0 0.0
  %1061 = vmatpush1.msra.mxu0 0.0
  %1062 = vmatprep.subr.mxu0 0.0
  %1063 = vmatpush1.msra.mxu0 0.0
  %1064 = vmatprep.subr.mxu0 0.0
  %1065 = vmatpush1.msra.mxu0 0.0
  %1066 = vmatprep.subr.mxu0 0.0
  %1067 = vmatpush1.msra.mxu0 0.0
  %1068 = vmatprep.subr.mxu0 0.0
  %1069 = vmatpush1.msra.mxu0 0.0
  %1070 = vmatprep.subr.mxu0 0.0
  %1071 = vmatpush1.msra.mxu0 0.0
  %1072 = vmatprep.subr.mxu0 0.0
  %1073 = vmatpush1.msra.mxu0 0.0
  %1074 = vmatprep.subr.mxu0 0.0
  %1075 = vmatpush1.msra.mxu0 0.0
  %1076 = vmatprep.subr.mxu0 0.0
  %1077 = vmatpush1.msra.mxu0 0.0
  %1078 = vmatprep.subr.mxu0 0.0
  %1079 = vmatpush1.msra.mxu0 0.0
  %1080 = vmatprep.subr.mxu0 0.0
  %1081 = vmatpush1.msra.mxu0 0.0
  %1082 = vmatprep.subr.mxu0 0.0
  %1083 = vmatpush1.msra.mxu0 0.0
  %1084 = vmatprep.subr.mxu0 0.0
  %1085 = vmatpush1.msra.mxu0 0.0
  %1086 = vmatprep.subr.mxu0 0.0
  %1087 = vmatpush1.msra.mxu0 0.0
  %1088 = vmatprep.subr.mxu0 0.0
  %1089 = vmatpush1.msra.mxu0 0.0
  %1090 = vmatprep.subr.mxu0 0.0
  %1091 = vmatpush1.msra.mxu0 0.0
  %1092 = vmatprep.mubr.f32.mxu0 0.0
  %1093 = vmatmul.mubr.f32.gmra.mrb[0].mxu0 %v1026
  %v1094 = vpop.f32.mrb[0].mxu0
  %v1095 = vadd.f32 %v235, %v1094
  %v1096 = vpop.f32.mrb[0].mxu0
  %1097 = vdwg.mxu0
  %v1098 = vtanh.pop %v1095
  %v1100 = vrot.slane %v1017, 4
  %v1101 = vsel %vm44, %v1100, 0
  %1103 = vmatprep.subr.mxu0 0.0
  %1104 = vmatpush1.msra.mxu0 %v142
  %1105 = vmatprep.subr.mxu0 0.0
  %1106 = vmatpush1.msra.mxu0 %v143
  %1107 = vmatprep.subr.mxu0 0.0
  %1108 = vmatpush1.msra.mxu0 %v144
  %1109 = vmatprep.subr.mxu0 0.0
  %1110 = vmatpush1.msra.mxu0 %v145
  %1111 = vmatprep.subr.mxu0 0.0
  %1112 = vmatpush1.msra.mxu0 0.0
  %1113 = vmatprep.subr.mxu0 0.0
  %1114 = vmatpush1.msra.mxu0 0.0
  %1115 = vmatprep.subr.mxu0 0.0
  %1116 = vmatpush1.msra.mxu0 0.0
  %1117 = vmatprep.subr.mxu0 0.0
  %1118 = vmatpush1.msra.mxu0 0.0
  %1119 = vmatprep.subr.mxu0 0.0
  %1120 = vmatpush1.msra.mxu0 0.0
  %1121 = vmatprep.subr.mxu0 0.0
  %1122 = vmatpush1.msra.mxu0 0.0
  %1123 = vmatprep.subr.mxu0 0.0
  %1124 = vmatpush1.msra.mxu0 0.0
  %1125 = vmatprep.subr.mxu0 0.0
  %1126 = vmatpush1.msra.mxu0 0.0
  %1127 = vmatprep.subr.mxu0 0.0
  %1128 = vmatpush1.msra.mxu0 0.0
  %1129 = vmatprep.subr.mxu0 0.0
  %1130 = vmatpush1.msra.mxu0 0.0
  %1131 = vmatprep.subr.mxu0 0.0
  %1132 = vmatpush1.msra.mxu0 0.0
  %1133 = vmatprep.subr.mxu0 0.0
  %1134 = vmatpush1.msra.mxu0 0.0
  %1135 = vmatprep.subr.mxu0 0.0
  %1136 = vmatpush1.msra.mxu0 0.0
  %1137 = vmatprep.subr.mxu0 0.0
  %1138 = vmatpush1.msra.mxu0 0.0
  %1139 = vmatprep.subr.mxu0 0.0
  %1140 = vmatpush1.msra.mxu0 0.0
  %1141 = vmatprep.subr.mxu0 0.0
  %1142 = vmatpush1.msra.mxu0 0.0
  %1143 = vmatprep.subr.mxu0 0.0
  %1144 = vmatpush1.msra.mxu0 0.0
  %1145 = vmatprep.subr.mxu0 0.0
  %1146 = vmatpush1.msra.mxu0 0.0
  %1147 = vmatprep.subr.mxu0 0.0
  %1148 = vmatpush1.msra.mxu0 0.0
  %1149 = vmatprep.subr.mxu0 0.0
  %1150 = vmatpush1.msra.mxu0 0.0
  %1151 = vmatprep.subr.mxu0 0.0
  %1152 = vmatpush1.msra.mxu0 0.0
  %1153 = vmatprep.subr.mxu0 0.0
  %1154 = vmatpush1.msra.mxu0 0.0
  %1155 = vmatprep.subr.mxu0 0.0
  %1156 = vmatpush1.msra.mxu0 0.0
  %1157 = vmatprep.subr.mxu0 0.0
  %1158 = vmatpush1.msra.mxu0 0.0
  %1159 = vmatprep.subr.mxu0 0.0
  %1160 = vmatpush1.msra.mxu0 0.0
  %1161 = vmatprep.subr.mxu0 0.0
  %1162 = vmatpush1.msra.mxu0 0.0
  %1163 = vmatprep.subr.mxu0 0.0
  %1164 = vmatpush1.msra.mxu0 0.0
  %1165 = vmatprep.subr.mxu0 0.0
  %1166 = vmatpush1.msra.mxu0 0.0
  %1167 = vmatprep.mubr.f32.mxu0 0.0
  %1168 = vmatmul.mubr.f32.gmra.mrb[0].mxu0 %v1101
  %v1169 = vpop.f32.mrb[0].mxu0
  %v1170 = vadd.f32 0.0, %v1169
  %v1171 = vpop.f32.mrb[0].mxu0
  %1172 = vdwg.mxu0
  %v1173 = vadd.f32 %v139, %v1170
  %v1174 = vtanh.pop %v1173
  %1176 = vrot.lane.b32.xlu0 %v1098, 32
  %v1177 = vpop.permute.xlu0 %1176
  %v1179 = vsel %vm44, %v1174, %v1177
  %v1181 = vsel %vm237, %v1179, 0
  %1183 = vmatprep.subr.mxu0 0.0
  %1184 = vmatpush1.msra.mxu0 %v146
  %1185 = vmatprep.subr.mxu0 0.0
  %1186 = vmatpush1.msra.mxu0 %v147
  %1187 = vmatprep.subr.mxu0 0.0
  %1188 = vmatpush1.msra.mxu0 %v148
  %1189 = vmatprep.subr.mxu0 0.0
  %1190 = vmatpush1.msra.mxu0 %v149
  %1191 = vmatprep.subr.mxu0 0.0
  %1192 = vmatpush1.msra.mxu0 %v150
  %1193 = vmatprep.subr.mxu0 0.0
  %1194 = vmatpush1.msra.mxu0 %v151
  %1195 = vmatprep.subr.mxu0 0.0
  %1196 = vmatpush1.msra.mxu0 %v152
  %1197 = vmatprep.subr.mxu0 0.0
  %1198 = vmatpush1.msra.mxu0 %v153
  %1199 = vmatprep.subr.mxu0 0.0
  %1200 = vmatpush1.msra.mxu0 0.0
  %1201 = vmatprep.subr.mxu0 0.0
  %1202 = vmatpush1.msra.mxu0 0.0
  %1203 = vmatprep.subr.mxu0 0.0
  %1204 = vmatpush1.msra.mxu0 0.0
  %1205 = vmatprep.subr.mxu0 0.0
  %1206 = vmatpush1.msra.mxu0 0.0
  %1207 = vmatprep.subr.mxu0 0.0
  %1208 = vmatpush1.msra.mxu0 0.0
  %1209 = vmatprep.subr.mxu0 0.0
  %1210 = vmatpush1.msra.mxu0 0.0
  %1211 = vmatprep.subr.mxu0 0.0
  %1212 = vmatpush1.msra.mxu0 0.0
  %1213 = vmatprep.subr.mxu0 0.0
  %1214 = vmatpush1.msra.mxu0 0.0
  %1215 = vmatprep.subr.mxu0 0.0
  %1216 = vmatpush1.msra.mxu0 0.0
  %1217 = vmatprep.subr.mxu0 0.0
  %1218 = vmatpush1.msra.mxu0 0.0
  %1219 = vmatprep.subr.mxu0 0.0
  %1220 = vmatpush1.msra.mxu0 0.0
  %1221 = vmatprep.subr.mxu0 0.0
  %1222 = vmatpush1.msra.mxu0 0.0
  %1223 = vmatprep.subr.mxu0 0.0
  %1224 = vmatpush1.msra.mxu0 0.0
  %1225 = vmatprep.subr.mxu0 0.0
  %1226 = vmatpush1.msra.mxu0 0.0
  %1227 = vmatprep.subr.mxu0 0.0
  %1228 = vmatpush1.msra.mxu0 0.0
  %1229 = vmatprep.subr.mxu0 0.0
  %1230 = vmatpush1.msra.mxu0 0.0
  %1231 = vmatprep.subr.mxu0 0.0
  %1232 = vmatpush1.msra.mxu0 0.0
  %1233 = vmatprep.subr.mxu0 0.0
  %1234 = vmatpush1.msra.mxu0 0.0
  %1235 = vmatprep.subr.mxu0 0.0
  %1236 = vmatpush1.msra.mxu0 0.0
  %1237 = vmatprep.subr.mxu0 0.0
  %1238 = vmatpush1.msra.mxu0 0.0
  %1239 = vmatprep.subr.mxu0 0.0
  %1240 = vmatpush1.msra.mxu0 0.0
  %1241 = vmatprep.subr.mxu0 0.0
  %1242 = vmatpush1.msra.mxu0 0.0
  %1243 = vmatprep.subr.mxu0 0.0
  %1244 = vmatpush1.msra.mxu0 0.0
  %1245 = vmatprep.subr.mxu0 0.0
  %1246 = vmatpush1.msra.mxu0 0.0
  %1247 = vmatprep.mubr.f32.mxu0 0.0
  %1248 = vmatmul.mubr.f32.gmra.mrb[0].mxu0 %v1181
  %v1249 = vpop.f32.mrb[0].mxu0
  %v1250 = vadd.f32 %v235, %v1249
  %v1251 = vpop.f32.mrb[0].mxu0
  %1252 = vdwg.mxu0
  %v1253 = vtanh.pop %v1250
  %v1255 = vsel %vm44, %v1174, 0
  %1257 = vmatprep.subr.mxu0 0.0
  %1258 = vmatpush1.msra.mxu0 %v142
  %1259 = vmatprep.subr.mxu0 0.0
  %1260 = vmatpush1.msra.mxu0 %v143
  %1261 = vmatprep.subr.mxu0 0.0
  %1262 = vmatpush1.msra.mxu0 %v144
  %1263 = vmatprep.subr.mxu0 0.0
  %1264 = vmatpush1.msra.mxu0 %v145
  %1265 = vmatprep.subr.mxu0 0.0
  %1266 = vmatpush1.msra.mxu0 0.0
  %1267 = vmatprep.subr.mxu0 0.0
  %1268 = vmatpush1.msra.mxu0 0.0
  %1269 = vmatprep.subr.mxu0 0.0
  %1270 = vmatpush1.msra.mxu0 0.0
  %1271 = vmatprep.subr.mxu0 0.0
  %1272 = vmatpush1.msra.mxu0 0.0
  %1273 = vmatprep.subr.mxu0 0.0
  %1274 = vmatpush1.msra.mxu0 0.0
  %1275 = vmatprep.subr.mxu0 0.0
  %1276 = vmatpush1.msra.mxu0 0.0
  %1277 = vmatprep.subr.mxu0 0.0
  %1278 = vmatpush1.msra.mxu0 0.0
  %1279 = vmatprep.subr.mxu0 0.0
  %1280 = vmatpush1.msra.mxu0 0.0
  %1281 = vmatprep.subr.mxu0 0.0
  %1282 = vmatpush1.msra.mxu0 0.0
  %1283 = vmatprep.subr.mxu0 0.0
  %1284 = vmatpush1.msra.mxu0 0.0
  %1285 = vmatprep.subr.mxu0 0.0
  %1286 = vmatpush1.msra.mxu0 0.0
  %1287 = vmatprep.subr.mxu0 0.0
  %1288 = vmatpush1.msra.mxu0 0.0
  %1289 = vmatprep.subr.mxu0 0.0
  %1290 = vmatpush1.msra.mxu0 0.0
  %1291 = vmatprep.subr.mxu0 0.0
  %1292 = vmatpush1.msra.mxu0 0.0
  %1293 = vmatprep.subr.mxu0 0.0
  %1294 = vmatpush1.msra.mxu0 0.0
  %1295 = vmatprep.subr.mxu0 0.0
  %1296 = vmatpush1.msra.mxu0 0.0
  %1297 = vmatprep.subr.mxu0 0.0
  %1298 = vmatpush1.msra.mxu0 0.0
  %1299 = vmatprep.subr.mxu0 0.0
  %1300 = vmatpush1.msra.mxu0 0.0
  %1301 = vmatprep.subr.mxu0 0.0
  %1302 = vmatpush1.msra.mxu0 0.0
  %1303 = vmatprep.subr.mxu0 0.0
  %1304 = vmatpush1.msra.mxu0 0.0
  %1305 = vmatprep.subr.mxu0 0.0
  %1306 = vmatpush1.msra.mxu0 0.0
  %1307 = vmatprep.subr.mxu0 0.0
  %1308 = vmatpush1.msra.mxu0 0.0
  %1309 = vmatprep.subr.mxu0 0.0
  %1310 = vmatpush1.msra.mxu0 0.0
  %1311 = vmatprep.subr.mxu0 0.0
  %1312 = vmatpush1.msra.mxu0 0.0
  %1313 = vmatprep.subr.mxu0 0.0
  %1314 = vmatpush1.msra.mxu0 0.0
  %1315 = vmatprep.subr.mxu0 0.0
  %1316 = vmatpush1.msra.mxu0 0.0
  %1317 = vmatprep.subr.mxu0 0.0
  %1318 = vmatpush1.msra.mxu0 0.0
  %1319 = vmatprep.subr.mxu0 0.0
  %1320 = vmatpush1.msra.mxu0 0.0
  %1321 = vmatprep.mubr.f32.mxu0 0.0
  %1322 = vmatmul.mubr.f32.gmra.mrb[0].mxu0 %v1255
  %v1323 = vpop.f32.mrb[0].mxu0
  %v1324 = vadd.f32 0.0, %v1323
  %v1325 = vpop.f32.mrb[0].mxu0
  %1326 = vdwg.mxu0
  %v1328 = vrot.slane %v1324, 4
  %v1330 = vadd.f32 %v139, %v1328
  %v1331 = vtanh.pop %v1330
  %v1333 = vrot.slane %v1253, 4
  %1334 = vrot.lane.b32.xlu0 %v1333, 32
  %v1335 = vpop.permute.xlu0 %1334
  %v1337 = vsel %vm44, %v1331, %v1335
  %v1339 = vrot.slane %v1337, 4
  %v1340 = vsel %vm237, %v1339, 0
  %1342 = vmatprep.subr.mxu0 0.0
  %1343 = vmatpush1.msra.mxu0 %v146
  %1344 = vmatprep.subr.mxu0 0.0
  %1345 = vmatpush1.msra.mxu0 %v147
  %1346 = vmatprep.subr.mxu0 0.0
  %1347 = vmatpush1.msra.mxu0 %v148
  %1348 = vmatprep.subr.mxu0 0.0
  %1349 = vmatpush1.msra.mxu0 %v149
  %1350 = vmatprep.subr.mxu0 0.0
  %1351 = vmatpush1.msra.mxu0 %v150
  %1352 = vmatprep.subr.mxu0 0.0
  %1353 = vmatpush1.msra.mxu0 %v151
  %1354 = vmatprep.subr.mxu0 0.0
  %1355 = vmatpush1.msra.mxu0 %v152
  %1356 = vmatprep.subr.mxu0 0.0
  %1357 = vmatpush1.msra.mxu0 %v153
  %1358 = vmatprep.subr.mxu0 0.0
  %1359 = vmatpush1.msra.mxu0 0.0
  %1360 = vmatprep.subr.mxu0 0.0
  %1361 = vmatpush1.msra.mxu0 0.0
  %1362 = vmatprep.subr.mxu0 0.0
  %1363 = vmatpush1.msra.mxu0 0.0
  %1364 = vmatprep.subr.mxu0 0.0
  %1365 = vmatpush1.msra.mxu0 0.0
  %1366 = vmatprep.subr.mxu0 0.0
  %1367 = vmatpush1.msra.mxu0 0.0
  %1368 = vmatprep.subr.mxu0 0.0
  %1369 = vmatpush1.msra.mxu0 0.0
  %1370 = vmatprep.subr.mxu0 0.0
  %1371 = vmatpush1.msra.mxu0 0.0
  %1372 = vmatprep.subr.mxu0 0.0
  %1373 = vmatpush1.msra.mxu0 0.0
  %1374 = vmatprep.subr.mxu0 0.0
  %1375 = vmatpush1.msra.mxu0 0.0
  %1376 = vmatprep.subr.mxu0 0.0
  %1377 = vmatpush1.msra.mxu0 0.0
  %1378 = vmatprep.subr.mxu0 0.0
  %1379 = vmatpush1.msra.mxu0 0.0
  %1380 = vmatprep.subr.mxu0 0.0
  %1381 = vmatpush1.msra.mxu0 0.0
  %1382 = vmatprep.subr.mxu0 0.0
  %1383 = vmatpush1.msra.mxu0 0.0
  %1384 = vmatprep.subr.mxu0 0.0
  %1385 = vmatpush1.msra.mxu0 0.0
  %1386 = vmatprep.subr.mxu0 0.0
  %1387 = vmatpush1.msra.mxu0 0.0
  %1388 = vmatprep.subr.mxu0 0.0
  %1389 = vmatpush1.msra.mxu0 0.0
  %1390 = vmatprep.subr.mxu0 0.0
  %1391 = vmatpush1.msra.mxu0 0.0
  %1392 = vmatprep.subr.mxu0 0.0
  %1393 = vmatpush1.msra.mxu0 0.0
  %1394 = vmatprep.subr.mxu0 0.0
  %1395 = vmatpush1.msra.mxu0 0.0
  %1396 = vmatprep.subr.mxu0 0.0
  %1397 = vmatpush1.msra.mxu0 0.0
  %1398 = vmatprep.subr.mxu0 0.0
  %1399 = vmatpush1.msra.mxu0 0.0
  %1400 = vmatprep.subr.mxu0 0.0
  %1401 = vmatpush1.msra.mxu0 0.0
  %1402 = vmatprep.subr.mxu0 0.0
  %1403 = vmatpush1.msra.mxu0 0.0
  %1404 = vmatprep.subr.mxu0 0.0
  %1405 = vmatpush1.msra.mxu0 0.0
  %1406 = vmatprep.mubr.f32.mxu0 0.0
  %1407 = vmatmul.mubr.f32.gmra.mrb[0].mxu0 %v1340
  %v1408 = vpop.f32.mrb[0].mxu0
  %v1409 = vadd.f32 %v235, %v1408
  %v1410 = vpop.f32.mrb[0].mxu0
  %1411 = vdwg.mxu0
  %v1412 = vtanh.pop %v1409
  %v1413 = vrot.slane %v470, 4
  %v1415 = vrot.slane %v784, 4
  %v1417 = vrot.slane %v1098, 4
  %v1420 = vrot.slane %v1412, 4
  %vm1422 = vcmask 1043456
  %v1423 = vsel %vm1422, %v311, %v1413
  %v1424 = vsel %vm1422, %v625, %v1415
  %v1425 = vsel %vm1422, %v939, %v1417
  %v1426 = vsel %vm1422, %v1253, %v1420
  %v1427 = vld [vmem:[%s6] sm:$0xff]
  %v1428 = vld [vmem:[%s6 + $0x8] sm:$0xff]
  %v1429 = vld [vmem:[%s6 + $0x10] sm:$0xff]
  %v1430 = vld [vmem:[%s6 + $0x18] sm:$0xff]
  %v1431 = vld [vmem:[%s7] sm:$0x1]
  %v1433 = vlaneseq
  %v1434 = vshrl.u32 %v1433, 7
  %v1435 = vsub.s32 0, %v1434
  %v1436 = vrot.slane %v1431, %v1435
  %v1439 = vsel %vm44, %v1423, 0
  %v1442 = vsel %vm44, %v1424, 0
  %v1445 = vsel %vm44, %v1425, 0
  %v1448 = vsel %vm44, %v1426, 0
  %1450 = vmatprep.subr.mxu0 0.0
  %1451 = vmatpush1.msra.mxu0 %v1427
  %1452 = vmatprep.subr.mxu0 0.0
  %1453 = vmatpush1.msra.mxu0 %v1428
  %1454 = vmatprep.subr.mxu0 0.0
  %1455 = vmatpush1.msra.mxu0 %v1429
  %1456 = vmatprep.subr.mxu0 0.0
  %1457 = vmatpush1.msra.mxu0 %v1430
  %1458 = vmatprep.subr.mxu0 0.0
  %1459 = vmatpush1.msra.mxu0 0.0
  %1460 = vmatprep.subr.mxu0 0.0
  %1461 = vmatpush1.msra.mxu0 0.0
  %1462 = vmatprep.subr.mxu0 0.0
  %1463 = vmatpush1.msra.mxu0 0.0
  %1464 = vmatprep.subr.mxu0 0.0
  %1465 = vmatpush1.msra.mxu0 0.0
  %1466 = vmatprep.subr.mxu0 0.0
  %1467 = vmatpush1.msra.mxu0 0.0
  %1468 = vmatprep.subr.mxu0 0.0
  %1469 = vmatpush1.msra.mxu0 0.0
  %1470 = vmatprep.subr.mxu0 0.0
  %1471 = vmatpush1.msra.mxu0 0.0
  %1472 = vmatprep.subr.mxu0 0.0
  %1473 = vmatpush1.msra.mxu0 0.0
  %1474 = vmatprep.subr.mxu0 0.0
  %1475 = vmatpush1.msra.mxu0 0.0
  %1476 = vmatprep.subr.mxu0 0.0
  %1477 = vmatpush1.msra.mxu0 0.0
  %1478 = vmatprep.subr.mxu0 0.0
  %1479 = vmatpush1.msra.mxu0 0.0
  %1480 = vmatprep.subr.mxu0 0.0
  %1481 = vmatpush1.msra.mxu0 0.0
  %1482 = vmatprep.subr.mxu0 0.0
  %1483 = vmatpush1.msra.mxu0 0.0
  %1484 = vmatprep.subr.mxu0 0.0
  %1485 = vmatpush1.msra.mxu0 0.0
  %1486 = vmatprep.subr.mxu0 0.0
  %1487 = vmatpush1.msra.mxu0 0.0
  %1488 = vmatprep.subr.mxu0 0.0
  %1489 = vmatpush1.msra.mxu0 0.0
  %1490 = vmatprep.subr.mxu0 0.0
  %1491 = vmatpush1.msra.mxu0 0.0
  %1492 = vmatprep.subr.mxu0 0.0
  %1493 = vmatpush1.msra.mxu0 0.0
  %1494 = vmatprep.subr.mxu0 0.0
  %1495 = vmatpush1.msra.mxu0 0.0
  %1496 = vmatprep.subr.mxu0 0.0
  %1497 = vmatpush1.msra.mxu0 0.0
  %1498 = vmatprep.subr.mxu0 0.0
  %1499 = vmatpush1.msra.mxu0 0.0
  %1500 = vmatprep.subr.mxu0 0.0
  %1501 = vmatpush1.msra.mxu0 0.0
  %1502 = vmatprep.subr.mxu0 0.0
  %1503 = vmatpush1.msra.mxu0 0.0
  %1504 = vmatprep.subr.mxu0 0.0
  %1505 = vmatpush1.msra.mxu0 0.0
  %1506 = vmatprep.subr.mxu0 0.0
  %1507 = vmatpush1.msra.mxu0 0.0
  %1508 = vmatprep.subr.mxu0 0.0
  %1509 = vmatpush1.msra.mxu0 0.0
  %1510 = vmatprep.subr.mxu0 0.0
  %1511 = vmatpush1.msra.mxu0 0.0
  %1512 = vmatprep.subr.mxu0 0.0
  %1513 = vmatpush1.msra.mxu0 0.0
  %1514 = vmatprep.mubr.f32.mxu0 0.0
  %1515 = vmatmul.mubr.f32.gmra.mrb[0].mxu0 %v1439
  %v1516 = vpop.f32.mrb[0].mxu0
  %v1517 = vadd.f32 %v1436, %v1516
  %v1518 = vpop.f32.mrb[0].mxu0
  %1519 = vmatprep.mubr.f32.mxu0 0.0
  %1520 = vmatmul.mubr.f32.gmra.mrb[0].mxu0 %v1442
  %v1521 = vpop.f32.mrb[0].mxu0
  %v1522 = vadd.f32 %v1436, %v1521
  %v1523 = vpop.f32.mrb[0].mxu0
  %1524 = vmatprep.mubr.f32.mxu0 0.0
  %1525 = vmatmul.mubr.f32.gmra.mrb[0].mxu0 %v1445
  %v1526 = vpop.f32.mrb[0].mxu0
  %v1527 = vadd.f32 %v1436, %v1526
  %v1528 = vpop.f32.mrb[0].mxu0
  %1529 = vmatprep.mubr.f32.mxu0 0.0
  %1530 = vmatmul.mubr.f32.gmra.mrb[0].mxu0 %v1448
  %v1531 = vpop.f32.mrb[0].mxu0
  %v1532 = vadd.f32 %v1436, %v1531
  %v1533 = vpop.f32.mrb[0].mxu0
  %1534 = vdwg.mxu0
  %vm1535 = vcmask 64512
  %1536 = vst.msk [vmem:[%s8] sm:$0xff] %vm1535, %v1517
  %1537 = vst.msk [vmem:[%s8 + $0x8] sm:$0xff] %vm1535, %v1522
  %1538 = vst.msk [vmem:[%s8 + $0x10] sm:$0xff] %vm1535, %v1527
  %1539 = vst.msk [vmem:[%s8 + $0x18] sm:$0xff] %vm1535, %v1532
  // Predicated region
  $region34: #{tpu_custom_call.1} parent=0 // pred_check
    _
  $region35: #{tpu_custom_call.1} parent=0 // pred_check_branch
    %1541 = sbr.rel (0) target = $region37
  $region36: #{tpu_custom_call.1} parent=0 // pred_region
    _
  $region37: #{tpu_custom_call.1} parent=0 // pred_fallthru
    _
  // Predicated region
  $region38: #{tpu_custom_call.1} parent=0 // pred_check
    _
  $region39: #{tpu_custom_call.1} parent=0 // pred_check_branch
    %1543 = sbr.rel (0) target = $region41
  $region40: #{tpu_custom_call.1} parent=0 // pred_region
    _
  $region41: #{tpu_custom_call.1} parent=0 // pred_fallthru
    _

</llo_original>
